<compile_context>
chip_gen: v7x
topology: tpu7x:2x2x1
jax: 0.10.0
libtpu: 0.0.40
codegen_flags: <defaults>
</compile_context>

<pallas_src>
import jax
import jax.numpy as jnp
from jax.experimental import pallas as pl
from jax.experimental.pallas import tpu as pltpu


# ----------------------------------------------------------------------------
# Kernel
# ----------------------------------------------------------------------------
def cnn_dual_kernel(xo_ref, xd_ref,
                    t1_ref, b1_ref, se1_ref, so1_ref,
                    t2_ref, b2_ref, se2_ref, so2_ref,
                    w3_ref, b3_ref, w4_ref, b4_ref,
                    w5a_ref, w5b_ref, b5_ref,
                    w6_ref, b6_ref, w7_ref, b7_ref,
                    out_ref):
    f32 = jnp.float32
    bf16 = jnp.bfloat16

    # ---- Conv1d(1, OC1, 16) + ReLU + MaxPool1d(2)  (packed: 3 matmuls) ----
    xo = xo_ref[...].astype(bf16)                                  # (TB, L)
    h = jnp.dot(xo, t1_ref[...], preferred_element_type=f32)       # (TB, OC1*L1)
    h = jnp.maximum(h + b1_ref[...], 0.0)                          # f32 VPU
    hb = h.astype(bf16)
    h = jnp.maximum(jnp.dot(hb, se1_ref[...], preferred_element_type=f32),
                    jnp.dot(hb, so1_ref[...], preferred_element_type=f32))
    # h: (TB, OC1*P1)

    # ---- Conv1d(OC1, 8, 16) + ReLU + MaxPool1d(2)  (packed: 3 matmuls) ----
    hb = h.astype(bf16)
    h = jnp.dot(hb, t2_ref[...], preferred_element_type=f32)       # (TB, OC2*L2)
    h = jnp.maximum(h + b2_ref[...], 0.0)
    hb = h.astype(bf16)
    h = jnp.maximum(jnp.dot(hb, se2_ref[...], preferred_element_type=f32),
                    jnp.dot(hb, so2_ref[...], preferred_element_type=f32))
    # h: (TB, OC2*P2) -- same ordering as torch Flatten of (B, OC2, P2)

    # ---- Flatten + LazyLinear(lin_ns) + ReLU  (Dropout == identity) ----
    y = jnp.dot(h.astype(bf16), w3_ref[...], preferred_element_type=f32)
    y = jnp.maximum(y + b3_ref[...], 0.0)

    # ---- Linear(lin_ns, lin_ns) + ReLU ----
    y = jnp.dot(y.astype(bf16), w4_ref[...], preferred_element_type=f32)
    y = jnp.maximum(y + b4_ref[...], 0.0)

    # ---- con_ff: concat(omic, xd) @ W5 == omic @ W5a + xd @ W5b ----
    xd = xd_ref[...].astype(bf16)
    z = (jnp.dot(y.astype(bf16), w5a_ref[...], preferred_element_type=f32)
         + jnp.dot(xd, w5b_ref[...], preferred_element_type=f32)
         + b5_ref[...])
    z = jnp.maximum(z, 0.0)
    # TODO(synk): nn.Dropout is implemented as eval-mode identity (no stochastic mask).
    z = jnp.dot(z.astype(bf16), w6_ref[...], preferred_element_type=f32)
    z = jnp.maximum(z + b6_ref[...], 0.0)

    # ---- LazyLinear(1): 1-lane output -> VPU multiply + lane reduction ----
    out = jnp.sum(z * w7_ref[...], axis=-1, keepdims=True) + b7_ref[...]
    out_ref[...] = out.astype(out_ref.dtype)                       # (TB, 1)


# ----------------------------------------------------------------------------
# Wrapper-side weight preprocessing
# ----------------------------------------------------------------------------
def _conv_toeplitz(w, l_in):
    """w: (..., K) -> T: (..., l_in, l_out) with T[..., j, t] = w[..., j - t]."""
    k = w.shape[-1]
    l_out = l_in - k + 1
    j = jnp.arange(l_in)[:, None]
    t = jnp.arange(l_out)[None, :]
    d = j - t
    valid = (d >= 0) & (d < k)
    dc = jnp.clip(d, 0, k - 1)
    gathered = jnp.take(w, dc, axis=-1)           # (..., l_in, l_out)
    return jnp.where(valid, gathered, 0.0).astype(jnp.float32)


def _block_pool_selectors(n_ch, length, pooled, dtype):
    """Block-diagonal one-hot even/odd selectors: (n_ch*length, n_ch*pooled)."""
    rows = jnp.arange(n_ch * length)[:, None]
    cols = jnp.arange(n_ch * pooled)[None, :]
    rch, rp = rows // length, rows % length
    cch, cp = cols // pooled, cols % pooled
    same = rch == cch
    se = (same & (rp == 2 * cp)).astype(dtype)
    so = (same & (rp == 2 * cp + 1)).astype(dtype)
    return se, so


def make_params(key, hps, L, d_drug):
    OC1 = hps['out_channels']
    OC2 = 8
    K = 16
    lin_ns = hps['linear_neurons']
    lin_ns2 = hps['linear_neurons2']
    L1 = L - K + 1
    P1 = L1 // 2
    L2 = P1 - K + 1
    P2 = L2 // 2
    flat = OC2 * P2

    ks = jax.random.split(key, 14)
    n = lambda k, s, sc=0.1: sc * jax.random.normal(k, s, jnp.float32)

    # "PyTorch-layout" raw weights
    w1 = n(ks[0], (OC1, K))                 # Conv1d(1, OC1, K) weight squeezed
    b1 = n(ks[1], (OC1,))
    w2 = n(ks[2], (OC2, OC1, K))
    b2 = n(ks[3], (OC2,))
    W3 = n(ks[4], (lin_ns, flat));   b3 = n(ks[5], (lin_ns,))
    W4 = n(ks[6], (lin_ns, lin_ns)); b4 = n(ks[7], (lin_ns,))
    W5 = n(ks[8], (lin_ns2, lin_ns + d_drug)); b5 = n(ks[9], (lin_ns2,))
    W6 = n(ks[10], (lin_ns2, lin_ns2)); b6 = n(ks[11], (lin_ns2,))
    W7 = n(ks[12], (1, lin_ns2)); b7 = n(ks[13], (1,))

    bf16 = jnp.bfloat16
    f32 = jnp.float32

    # Packed conv-1 Toeplitz: (L, OC1*L1), cols ordered [oc*L1 + t].
    T1 = _conv_toeplitz(w1, L)                                  # (OC1, L, L1)
    T1p = T1.transpose(1, 0, 2).reshape(L, OC1 * L1).astype(bf16)
    b1p = jnp.broadcast_to(b1[:, None], (OC1, L1)).reshape(1, OC1 * L1).astype(f32)

    # Packed conv-2 Toeplitz: (OC1*P1, OC2*L2), rows [ic*P1+p], cols [oc*L2+t].
    T2 = _conv_toeplitz(w2, P1)                                 # (OC2, OC1, P1, L2)
    T2p = T2.transpose(1, 2, 0, 3).reshape(OC1 * P1, OC2 * L2).astype(bf16)
    b2p = jnp.broadcast_to(b2[:, None], (OC2, L2)).reshape(1, OC2 * L2).astype(f32)

    # Precomputed block-diagonal max-pool selectors (0/1 -> exact in bf16).
    se1, so1 = _block_pool_selectors(OC1, L1, P1, bf16)
    se2, so2 = _block_pool_selectors(OC2, L2, P2, bf16)

    params = dict(
        T1=T1p, b1=b1p, se1=se1, so1=so1,
        T2=T2p, b2=b2p, se2=se2, so2=so2,
        # Torch Flatten of (B, OC2, P2) gives index [c*P2 + l] == packed layout.
        w3=W3.T.astype(bf16), b3=b3.reshape(1, lin_ns).astype(f32),
        w4=W4.T.astype(bf16), b4=b4.reshape(1, lin_ns).astype(f32),
        w5a=W5[:, :lin_ns].T.astype(bf16),       # (lin_ns, lin_ns2)
        w5b=W5[:, lin_ns:].T.astype(bf16),       # (d_drug, lin_ns2)
        b5=b5.reshape(1, lin_ns2).astype(f32),
        w6=W6.T.astype(bf16), b6=b6.reshape(1, lin_ns2).astype(f32),
        w7=W7.astype(f32),                       # (1, lin_ns2) row, VPU path in f32
        b7=b7.reshape(1, 1).astype(f32),
    )
    return params


# ----------------------------------------------------------------------------
# pallas_call wrapper
# ----------------------------------------------------------------------------
@jax.jit
def cnn_dual_inputs_forward(xo, xd, params):
    # xo: (B, 1, L) NCW like PyTorch; squeeze the single channel.
    B = xo.shape[0]
    L = xo.shape[-1]
    xo2d = xo.reshape(B, L).astype(jnp.float32)
    xd2d = xd.astype(jnp.float32)
    Dd = xd2d.shape[-1]

    # Batch grid: tile of up to 256 rows (fills the 256x256 MXU on v6e/v7x);
    # marked "parallel" so >=2 blocks shard across v7x's two TensorCores.
    TB = 256 if B > 256 else B
    Bp = ((B + TB - 1) // TB) * TB
    if Bp != B:
        xo2d = jnp.pad(xo2d, ((0, Bp - B), (0, 0)))
        xd2d = jnp.pad(xd2d, ((0, Bp - B), (0, 0)))
    grid = (Bp // TB,)

    def rep(arr):
        # Full-array block, same block index every step -> weights stay
        # resident in VMEM (DMA'd once, no per-step refetch).
        nd = arr.ndim
        return pl.BlockSpec(arr.shape, lambda i, _nd=nd: (0,) * _nd)

    weight_order = ('T1', 'b1', 'se1', 'so1', 'T2', 'b2', 'se2', 'so2',
                    'w3', 'b3', 'w4', 'b4', 'w5a', 'w5b', 'b5',
                    'w6', 'b6', 'w7', 'b7')
    weights = [params[k] for k in weight_order]

    in_specs = [pl.BlockSpec((TB, L), lambda i: (i, 0)),    # xo
                pl.BlockSpec((TB, Dd), lambda i: (i, 0))]   # xd
    in_specs += [rep(w) for w in weights]

    out = pl.pallas_call(
        cnn_dual_kernel,
        out_shape=jax.ShapeDtypeStruct((Bp, 1), jnp.float32),
        grid=grid,
        in_specs=in_specs,
        out_specs=pl.BlockSpec((TB, 1), lambda i: (i, 0)),
        compiler_params=pltpu.CompilerParams(
            dimension_semantics=("parallel",)),
    )(xo2d, xd2d, *weights)
    return out[:B]


if __name__ == "__main__":
    hps = dict(out_channels=4, linear_neurons=32, linear_neurons2=16, drop_p=0.25)
    B, L, D_DRUG = 2, 128, 8

    key = jax.random.PRNGKey(0)
    k_xo, k_xd, k_params = jax.random.split(key, 3)
    xo = jax.random.normal(k_xo, (B, 1, L), jnp.float32)   # (B, C=1, L) NCW
    xd = jax.random.normal(k_xd, (B, D_DRUG), jnp.float32)

    params = make_params(k_params, hps, L, D_DRUG)

    out = cnn_dual_inputs_forward(xo, xd, params)
    out = jax.block_until_ready(out)

    assert out.shape == (B, 1)
    assert bool(jnp.all(jnp.isfinite(out)))
    print("KERNEL_OK")
</pallas_src>

<mosaic_0001>
module attributes {stable_mosaic.version = 11 : i64} {
  func.func @cnn_dual_kernel(%arg0: i32, %arg1: memref<2x128xf32, #tpu.memory_space<vmem>>, %arg2: memref<2x8xf32, #tpu.memory_space<vmem>>, %arg3: memref<128x452xbf16, #tpu.memory_space<vmem>>, %arg4: memref<1x452xf32, #tpu.memory_space<vmem>>, %arg5: memref<452x224xbf16, #tpu.memory_space<vmem>>, %arg6: memref<452x224xbf16, #tpu.memory_space<vmem>>, %arg7: memref<224x328xbf16, #tpu.memory_space<vmem>>, %arg8: memref<1x328xf32, #tpu.memory_space<vmem>>, %arg9: memref<328x160xbf16, #tpu.memory_space<vmem>>, %arg10: memref<328x160xbf16, #tpu.memory_space<vmem>>, %arg11: memref<160x32xbf16, #tpu.memory_space<vmem>>, %arg12: memref<1x32xf32, #tpu.memory_space<vmem>>, %arg13: memref<32x32xbf16, #tpu.memory_space<vmem>>, %arg14: memref<1x32xf32, #tpu.memory_space<vmem>>, %arg15: memref<32x16xbf16, #tpu.memory_space<vmem>>, %arg16: memref<8x16xbf16, #tpu.memory_space<vmem>>, %arg17: memref<1x16xf32, #tpu.memory_space<vmem>>, %arg18: memref<16x16xbf16, #tpu.memory_space<vmem>>, %arg19: memref<1x16xf32, #tpu.memory_space<vmem>>, %arg20: memref<1x16xf32, #tpu.memory_space<vmem>>, %arg21: memref<1x1xf32, #tpu.memory_space<vmem>>, %arg22: memref<2x1xf32, #tpu.memory_space<vmem>>) attributes {dimension_semantics = [#tpu.dimension_semantics<parallel>], iteration_bounds = array<i64: 1>, scalar_prefetch = 0 : i64, scratch_operands = 0 : i64, tpu.core_type = #tpu.core_type<tc>, window_params = [{transform_indices = @transform_0, window_bounds = array<i64: 2, 128>}, {transform_indices = @transform_1, window_bounds = array<i64: 2, 8>}, {pipeline_mode = #tpu.pipeline_mode<synchronous>, transform_indices = @transform_2, window_bounds = array<i64: 128, 452>}, {pipeline_mode = #tpu.pipeline_mode<synchronous>, transform_indices = @transform_3, window_bounds = array<i64: 1, 452>}, {pipeline_mode = #tpu.pipeline_mode<synchronous>, transform_indices = @transform_4, window_bounds = array<i64: 452, 224>}, {pipeline_mode = #tpu.pipeline_mode<synchronous>, transform_indices = @transform_5, window_bounds = array<i64: 452, 224>}, {pipeline_mode = #tpu.pipeline_mode<synchronous>, transform_indices = @transform_6, window_bounds = array<i64: 224, 328>}, {pipeline_mode = #tpu.pipeline_mode<synchronous>, transform_indices = @transform_7, window_bounds = array<i64: 1, 328>}, {pipeline_mode = #tpu.pipeline_mode<synchronous>, transform_indices = @transform_8, window_bounds = array<i64: 328, 160>}, {pipeline_mode = #tpu.pipeline_mode<synchronous>, transform_indices = @transform_9, window_bounds = array<i64: 328, 160>}, {pipeline_mode = #tpu.pipeline_mode<synchronous>, transform_indices = @transform_10, window_bounds = array<i64: 160, 32>}, {pipeline_mode = #tpu.pipeline_mode<synchronous>, transform_indices = @transform_11, window_bounds = array<i64: 1, 32>}, {pipeline_mode = #tpu.pipeline_mode<synchronous>, transform_indices = @transform_12, window_bounds = array<i64: 32, 32>}, {pipeline_mode = #tpu.pipeline_mode<synchronous>, transform_indices = @transform_13, window_bounds = array<i64: 1, 32>}, {pipeline_mode = #tpu.pipeline_mode<synchronous>, transform_indices = @transform_14, window_bounds = array<i64: 32, 16>}, {pipeline_mode = #tpu.pipeline_mode<synchronous>, transform_indices = @transform_15, window_bounds = array<i64: 8, 16>}, {pipeline_mode = #tpu.pipeline_mode<synchronous>, transform_indices = @transform_16, window_bounds = array<i64: 1, 16>}, {pipeline_mode = #tpu.pipeline_mode<synchronous>, transform_indices = @transform_17, window_bounds = array<i64: 16, 16>}, {pipeline_mode = #tpu.pipeline_mode<synchronous>, transform_indices = @transform_18, window_bounds = array<i64: 1, 16>}, {pipeline_mode = #tpu.pipeline_mode<synchronous>, transform_indices = @transform_19, window_bounds = array<i64: 1, 16>}, {pipeline_mode = #tpu.pipeline_mode<synchronous>, transform_indices = @transform_20, window_bounds = array<i64: 1, 1>}, {transform_indices = @transform_21, window_bounds = array<i64: 2, 1>}]} {
    %c0 = arith.constant 0 : index
    %c0_0 = arith.constant 0 : index
    %0 = vector.load %arg1[%c0, %c0_0] : memref<2x128xf32, #tpu.memory_space<vmem>>, vector<2x128xf32>
    %1 = arith.truncf %0 : vector<2x128xf32> to vector<2x128xbf16>
    %c0_1 = arith.constant 0 : index
    %c0_2 = arith.constant 0 : index
    %2 = vector.load %arg3[%c0_1, %c0_2] : memref<128x452xbf16, #tpu.memory_space<vmem>>, vector<128x452xbf16>
    %cst = arith.constant dense<0.000000e+00> : vector<2x452xf32>
    %3 = tpu.matmul %1, %2, %cst {dimension_numbers = #tpu.dot_dimension_numbers<[1], [0], [0], [1], [0, 0, 1, 1], [], []>} : vector<2x128xbf16>, vector<128x452xbf16>, vector<2x452xf32> -> vector<2x452xf32>
    %c0_3 = arith.constant 0 : index
    %c0_4 = arith.constant 0 : index
    %4 = vector.load %arg4[%c0_3, %c0_4] : memref<1x452xf32, #tpu.memory_space<vmem>>, vector<1x452xf32>
    %5 = vector.broadcast %4 : vector<1x452xf32> to vector<2x452xf32>
    %6 = arith.addf %3, %5 : vector<2x452xf32>
    %cst_5 = arith.constant 0.000000e+00 : f32
    %7 = vector.broadcast %cst_5 : f32 to vector<2x452xf32>
    %8 = arith.maximumf %6, %7 : vector<2x452xf32>
    %9 = arith.truncf %8 : vector<2x452xf32> to vector<2x452xbf16>
    %c0_6 = arith.constant 0 : index
    %c0_7 = arith.constant 0 : index
    %10 = vector.load %arg5[%c0_6, %c0_7] : memref<452x224xbf16, #tpu.memory_space<vmem>>, vector<452x224xbf16>
    %cst_8 = arith.constant dense<0.000000e+00> : vector<2x224xf32>
    %11 = tpu.matmul %9, %10, %cst_8 {dimension_numbers = #tpu.dot_dimension_numbers<[1], [0], [0], [1], [0, 0, 1, 1], [], []>} : vector<2x452xbf16>, vector<452x224xbf16>, vector<2x224xf32> -> vector<2x224xf32>
    %c0_9 = arith.constant 0 : index
    %c0_10 = arith.constant 0 : index
    %12 = vector.load %arg6[%c0_9, %c0_10] : memref<452x224xbf16, #tpu.memory_space<vmem>>, vector<452x224xbf16>
    %cst_11 = arith.constant dense<0.000000e+00> : vector<2x224xf32>
    %13 = tpu.matmul %9, %12, %cst_11 {dimension_numbers = #tpu.dot_dimension_numbers<[1], [0], [0], [1], [0, 0, 1, 1], [], []>} : vector<2x452xbf16>, vector<452x224xbf16>, vector<2x224xf32> -> vector<2x224xf32>
    %14 = arith.maximumf %11, %13 : vector<2x224xf32>
    %15 = arith.truncf %14 : vector<2x224xf32> to vector<2x224xbf16>
    %c0_12 = arith.constant 0 : index
    %c0_13 = arith.constant 0 : index
    %16 = vector.load %arg7[%c0_12, %c0_13] : memref<224x328xbf16, #tpu.memory_space<vmem>>, vector<224x328xbf16>
    %cst_14 = arith.constant dense<0.000000e+00> : vector<2x328xf32>
    %17 = tpu.matmul %15, %16, %cst_14 {dimension_numbers = #tpu.dot_dimension_numbers<[1], [0], [0], [1], [0, 0, 1, 1], [], []>} : vector<2x224xbf16>, vector<224x328xbf16>, vector<2x328xf32> -> vector<2x328xf32>
    %c0_15 = arith.constant 0 : index
    %c0_16 = arith.constant 0 : index
    %18 = vector.load %arg8[%c0_15, %c0_16] : memref<1x328xf32, #tpu.memory_space<vmem>>, vector<1x328xf32>
    %19 = vector.broadcast %18 : vector<1x328xf32> to vector<2x328xf32>
    %20 = arith.addf %17, %19 : vector<2x328xf32>
    %cst_17 = arith.constant 0.000000e+00 : f32
    %21 = vector.broadcast %cst_17 : f32 to vector<2x328xf32>
    %22 = arith.maximumf %20, %21 : vector<2x328xf32>
    %23 = arith.truncf %22 : vector<2x328xf32> to vector<2x328xbf16>
    %c0_18 = arith.constant 0 : index
    %c0_19 = arith.constant 0 : index
    %24 = vector.load %arg9[%c0_18, %c0_19] : memref<328x160xbf16, #tpu.memory_space<vmem>>, vector<328x160xbf16>
    %cst_20 = arith.constant dense<0.000000e+00> : vector<2x160xf32>
    %25 = tpu.matmul %23, %24, %cst_20 {dimension_numbers = #tpu.dot_dimension_numbers<[1], [0], [0], [1], [0, 0, 1, 1], [], []>} : vector<2x328xbf16>, vector<328x160xbf16>, vector<2x160xf32> -> vector<2x160xf32>
    %c0_21 = arith.constant 0 : index
    %c0_22 = arith.constant 0 : index
    %26 = vector.load %arg10[%c0_21, %c0_22] : memref<328x160xbf16, #tpu.memory_space<vmem>>, vector<328x160xbf16>
    %cst_23 = arith.constant dense<0.000000e+00> : vector<2x160xf32>
    %27 = tpu.matmul %23, %26, %cst_23 {dimension_numbers = #tpu.dot_dimension_numbers<[1], [0], [0], [1], [0, 0, 1, 1], [], []>} : vector<2x328xbf16>, vector<328x160xbf16>, vector<2x160xf32> -> vector<2x160xf32>
    %28 = arith.maximumf %25, %27 : vector<2x160xf32>
    %29 = arith.truncf %28 : vector<2x160xf32> to vector<2x160xbf16>
    %c0_24 = arith.constant 0 : index
    %c0_25 = arith.constant 0 : index
    %30 = vector.load %arg11[%c0_24, %c0_25] : memref<160x32xbf16, #tpu.memory_space<vmem>>, vector<160x32xbf16>
    %cst_26 = arith.constant dense<0.000000e+00> : vector<2x32xf32>
    %31 = tpu.matmul %29, %30, %cst_26 {dimension_numbers = #tpu.dot_dimension_numbers<[1], [0], [0], [1], [0, 0, 1, 1], [], []>} : vector<2x160xbf16>, vector<160x32xbf16>, vector<2x32xf32> -> vector<2x32xf32>
    %c0_27 = arith.constant 0 : index
    %c0_28 = arith.constant 0 : index
    %32 = vector.load %arg12[%c0_27, %c0_28] : memref<1x32xf32, #tpu.memory_space<vmem>>, vector<1x32xf32>
    %33 = vector.broadcast %32 : vector<1x32xf32> to vector<2x32xf32>
    %34 = arith.addf %31, %33 : vector<2x32xf32>
    %cst_29 = arith.constant 0.000000e+00 : f32
    %35 = vector.broadcast %cst_29 : f32 to vector<2x32xf32>
    %36 = arith.maximumf %34, %35 : vector<2x32xf32>
    %37 = arith.truncf %36 : vector<2x32xf32> to vector<2x32xbf16>
    %c0_30 = arith.constant 0 : index
    %c0_31 = arith.constant 0 : index
    %38 = vector.load %arg13[%c0_30, %c0_31] : memref<32x32xbf16, #tpu.memory_space<vmem>>, vector<32x32xbf16>
    %cst_32 = arith.constant dense<0.000000e+00> : vector<2x32xf32>
    %39 = tpu.matmul %37, %38, %cst_32 {dimension_numbers = #tpu.dot_dimension_numbers<[1], [0], [0], [1], [0, 0, 1, 1], [], []>} : vector<2x32xbf16>, vector<32x32xbf16>, vector<2x32xf32> -> vector<2x32xf32>
    %c0_33 = arith.constant 0 : index
    %c0_34 = arith.constant 0 : index
    %40 = vector.load %arg14[%c0_33, %c0_34] : memref<1x32xf32, #tpu.memory_space<vmem>>, vector<1x32xf32>
    %41 = vector.broadcast %40 : vector<1x32xf32> to vector<2x32xf32>
    %42 = arith.addf %39, %41 : vector<2x32xf32>
    %cst_35 = arith.constant 0.000000e+00 : f32
    %43 = vector.broadcast %cst_35 : f32 to vector<2x32xf32>
    %44 = arith.maximumf %42, %43 : vector<2x32xf32>
    %c0_36 = arith.constant 0 : index
    %c0_37 = arith.constant 0 : index
    %45 = vector.load %arg2[%c0_36, %c0_37] : memref<2x8xf32, #tpu.memory_space<vmem>>, vector<2x8xf32>
    %46 = arith.truncf %45 : vector<2x8xf32> to vector<2x8xbf16>
    %47 = arith.truncf %44 : vector<2x32xf32> to vector<2x32xbf16>
    %c0_38 = arith.constant 0 : index
    %c0_39 = arith.constant 0 : index
    %48 = vector.load %arg15[%c0_38, %c0_39] : memref<32x16xbf16, #tpu.memory_space<vmem>>, vector<32x16xbf16>
    %cst_40 = arith.constant dense<0.000000e+00> : vector<2x16xf32>
    %49 = tpu.matmul %47, %48, %cst_40 {dimension_numbers = #tpu.dot_dimension_numbers<[1], [0], [0], [1], [0, 0, 1, 1], [], []>} : vector<2x32xbf16>, vector<32x16xbf16>, vector<2x16xf32> -> vector<2x16xf32>
    %c0_41 = arith.constant 0 : index
    %c0_42 = arith.constant 0 : index
    %50 = vector.load %arg16[%c0_41, %c0_42] : memref<8x16xbf16, #tpu.memory_space<vmem>>, vector<8x16xbf16>
    %cst_43 = arith.constant dense<0.000000e+00> : vector<2x16xf32>
    %51 = tpu.matmul %46, %50, %cst_43 {dimension_numbers = #tpu.dot_dimension_numbers<[1], [0], [0], [1], [0, 0, 1, 1], [], []>} : vector<2x8xbf16>, vector<8x16xbf16>, vector<2x16xf32> -> vector<2x16xf32>
    %52 = arith.addf %49, %51 : vector<2x16xf32>
    %c0_44 = arith.constant 0 : index
    %c0_45 = arith.constant 0 : index
    %53 = vector.load %arg17[%c0_44, %c0_45] : memref<1x16xf32, #tpu.memory_space<vmem>>, vector<1x16xf32>
    %54 = vector.broadcast %53 : vector<1x16xf32> to vector<2x16xf32>
    %55 = arith.addf %52, %54 : vector<2x16xf32>
    %cst_46 = arith.constant 0.000000e+00 : f32
    %56 = vector.broadcast %cst_46 : f32 to vector<2x16xf32>
    %57 = arith.maximumf %55, %56 : vector<2x16xf32>
    %58 = arith.truncf %57 : vector<2x16xf32> to vector<2x16xbf16>
    %c0_47 = arith.constant 0 : index
    %c0_48 = arith.constant 0 : index
    %59 = vector.load %arg18[%c0_47, %c0_48] : memref<16x16xbf16, #tpu.memory_space<vmem>>, vector<16x16xbf16>
    %cst_49 = arith.constant dense<0.000000e+00> : vector<2x16xf32>
    %60 = tpu.matmul %58, %59, %cst_49 {dimension_numbers = #tpu.dot_dimension_numbers<[1], [0], [0], [1], [0, 0, 1, 1], [], []>} : vector<2x16xbf16>, vector<16x16xbf16>, vector<2x16xf32> -> vector<2x16xf32>
    %c0_50 = arith.constant 0 : index
    %c0_51 = arith.constant 0 : index
    %61 = vector.load %arg19[%c0_50, %c0_51] : memref<1x16xf32, #tpu.memory_space<vmem>>, vector<1x16xf32>
    %62 = vector.broadcast %61 : vector<1x16xf32> to vector<2x16xf32>
    %63 = arith.addf %60, %62 : vector<2x16xf32>
    %cst_52 = arith.constant 0.000000e+00 : f32
    %64 = vector.broadcast %cst_52 : f32 to vector<2x16xf32>
    %65 = arith.maximumf %63, %64 : vector<2x16xf32>
    %c0_53 = arith.constant 0 : index
    %c0_54 = arith.constant 0 : index
    %66 = vector.load %arg20[%c0_53, %c0_54] : memref<1x16xf32, #tpu.memory_space<vmem>>, vector<1x16xf32>
    %67 = vector.broadcast %66 : vector<1x16xf32> to vector<2x16xf32>
    %68 = arith.mulf %65, %67 : vector<2x16xf32>
    %cst_55 = arith.constant dense<0.000000e+00> : vector<2xf32>
    %69 = vector.multi_reduction <add>, %68, %cst_55 [1] : vector<2x16xf32> to vector<2xf32>
    %70 = vector.shape_cast %69 : vector<2xf32> to vector<2x1xf32>
    %c0_56 = arith.constant 0 : index
    %c0_57 = arith.constant 0 : index
    %71 = vector.load %arg21[%c0_56, %c0_57] : memref<1x1xf32, #tpu.memory_space<vmem>>, vector<1x1xf32>
    %72 = vector.broadcast %71 : vector<1x1xf32> to vector<2x1xf32>
    %73 = arith.addf %70, %72 : vector<2x1xf32>
    %c0_58 = arith.constant 0 : index
    %c0_59 = arith.constant 0 : index
    %74 = vector.load %arg22[%c0_58, %c0_59] : memref<2x1xf32, #tpu.memory_space<vmem>>, vector<2x1xf32>
    tpu.vector_store %arg22[%c0_58, %c0_59], %73 {strides = array<i32>} : memref<2x1xf32, #tpu.memory_space<vmem>>, vector<2x1xf32>,
    return
  }
  func.func @transform_0(%arg0: i32) -> (i32, i32) {
    %c0_i32 = arith.constant 0 : i32
    %c0_i32_0 = arith.constant 0 : i32
    return %arg0, %c0_i32 : i32, i32
  }
  func.func @transform_1(%arg0: i32) -> (i32, i32) {
    %c0_i32 = arith.constant 0 : i32
    %c0_i32_0 = arith.constant 0 : i32
    return %arg0, %c0_i32 : i32, i32
  }
  func.func @transform_2(%arg0: i32) -> (i32, i32) {
    %c0_i32 = arith.constant 0 : i32
    %c0_i32_0 = arith.constant 0 : i32
    %c0_i32_1 = arith.constant 0 : i32
    return %c0_i32, %c0_i32_0 : i32, i32
  }
  func.func @transform_3(%arg0: i32) -> (i32, i32) {
    %c0_i32 = arith.constant 0 : i32
    %c0_i32_0 = arith.constant 0 : i32
    %c0_i32_1 = arith.constant 0 : i32
    return %c0_i32, %c0_i32_0 : i32, i32
  }
  func.func @transform_4(%arg0: i32) -> (i32, i32) {
    %c0_i32 = arith.constant 0 : i32
    %c0_i32_0 = arith.constant 0 : i32
    %c0_i32_1 = arith.constant 0 : i32
    return %c0_i32, %c0_i32_0 : i32, i32
  }
  func.func @transform_5(%arg0: i32) -> (i32, i32) {
    %c0_i32 = arith.constant 0 : i32
    %c0_i32_0 = arith.constant 0 : i32
    %c0_i32_1 = arith.constant 0 : i32
    return %c0_i32, %c0_i32_0 : i32, i32
  }
  func.func @transform_6(%arg0: i32) -> (i32, i32) {
    %c0_i32 = arith.constant 0 : i32
    %c0_i32_0 = arith.constant 0 : i32
    %c0_i32_1 = arith.constant 0 : i32
    return %c0_i32, %c0_i32_0 : i32, i32
  }
  func.func @transform_7(%arg0: i32) -> (i32, i32) {
    %c0_i32 = arith.constant 0 : i32
    %c0_i32_0 = arith.constant 0 : i32
    %c0_i32_1 = arith.constant 0 : i32
    return %c0_i32, %c0_i32_0 : i32, i32
  }
  func.func @transform_8(%arg0: i32) -> (i32, i32) {
    %c0_i32 = arith.constant 0 : i32
    %c0_i32_0 = arith.constant 0 : i32
    %c0_i32_1 = arith.constant 0 : i32
    return %c0_i32, %c0_i32_0 : i32, i32
  }
  func.func @transform_9(%arg0: i32) -> (i32, i32) {
    %c0_i32 = arith.constant 0 : i32
    %c0_i32_0 = arith.constant 0 : i32
    %c0_i32_1 = arith.constant 0 : i32
    return %c0_i32, %c0_i32_0 : i32, i32
  }
  func.func @transform_10(%arg0: i32) -> (i32, i32) {
    %c0_i32 = arith.constant 0 : i32
    %c0_i32_0 = arith.constant 0 : i32
    %c0_i32_1 = arith.constant 0 : i32
    return %c0_i32, %c0_i32_0 : i32, i32
  }
  func.func @transform_11(%arg0: i32) -> (i32, i32) {
    %c0_i32 = arith.constant 0 : i32
    %c0_i32_0 = arith.constant 0 : i32
    %c0_i32_1 = arith.constant 0 : i32
    return %c0_i32, %c0_i32_0 : i32, i32
  }
  func.func @transform_12(%arg0: i32) -> (i32, i32) {
    %c0_i32 = arith.constant 0 : i32
    %c0_i32_0 = arith.constant 0 : i32
    %c0_i32_1 = arith.constant 0 : i32
    return %c0_i32, %c0_i32_0 : i32, i32
  }
  func.func @transform_13(%arg0: i32) -> (i32, i32) {
    %c0_i32 = arith.constant 0 : i32
    %c0_i32_0 = arith.constant 0 : i32
    %c0_i32_1 = arith.constant 0 : i32
    return %c0_i32, %c0_i32_0 : i32, i32
  }
  func.func @transform_14(%arg0: i32) -> (i32, i32) {
    %c0_i32 = arith.constant 0 : i32
    %c0_i32_0 = arith.constant 0 : i32
    %c0_i32_1 = arith.constant 0 : i32
    return %c0_i32, %c0_i32_0 : i32, i32
  }
  func.func @transform_15(%arg0: i32) -> (i32, i32) {
    %c0_i32 = arith.constant 0 : i32
    %c0_i32_0 = arith.constant 0 : i32
    %c0_i32_1 = arith.constant 0 : i32
    return %c0_i32, %c0_i32_0 : i32, i32
  }
  func.func @transform_16(%arg0: i32) -> (i32, i32) {
    %c0_i32 = arith.constant 0 : i32
    %c0_i32_0 = arith.constant 0 : i32
    %c0_i32_1 = arith.constant 0 : i32
    return %c0_i32, %c0_i32_0 : i32, i32
  }
  func.func @transform_17(%arg0: i32) -> (i32, i32) {
    %c0_i32 = arith.constant 0 : i32
    %c0_i32_0 = arith.constant 0 : i32
    %c0_i32_1 = arith.constant 0 : i32
    return %c0_i32, %c0_i32_0 : i32, i32
  }
  func.func @transform_18(%arg0: i32) -> (i32, i32) {
    %c0_i32 = arith.constant 0 : i32
    %c0_i32_0 = arith.constant 0 : i32
    %c0_i32_1 = arith.constant 0 : i32
    return %c0_i32, %c0_i32_0 : i32, i32
  }
  func.func @transform_19(%arg0: i32) -> (i32, i32) {
    %c0_i32 = arith.constant 0 : i32
    %c0_i32_0 = arith.constant 0 : i32
    %c0_i32_1 = arith.constant 0 : i32
    return %c0_i32, %c0_i32_0 : i32, i32
  }
  func.func @transform_20(%arg0: i32) -> (i32, i32) {
    %c0_i32 = arith.constant 0 : i32
    %c0_i32_0 = arith.constant 0 : i32
    %c0_i32_1 = arith.constant 0 : i32
    return %c0_i32, %c0_i32_0 : i32, i32
  }
  func.func @transform_21(%arg0: i32) -> (i32, i32) {
    %c0_i32 = arith.constant 0 : i32
    %c0_i32_0 = arith.constant 0 : i32
    return %arg0, %c0_i32 : i32, i32
  }
}

</mosaic_0001>

<llo_original>
// kernel: cnn_dual_inputs_forward.1
$region0: #{cnn_dual_inputs_forward.1}
  #allocation0 [shape = 'u32[]', space=smem, size = 0x4, offset = 0x4, fixed_abs, tag = 'smem constant byte address 0x4 - core index']
  #allocation1 [shape = 'u32[144,128]{1,0:T(1,128)}', space=vmem, size = 0x12000, scoped, tag = 'internal scratch']
  #allocation2 [shape = 'f32[1,1]{1,0:T(1,128)S(1)}', space=vmem, size = 0x200, scoped, tag = 'scoped memory for cnn_dual_inputs_forward.1']
  %s0 = inlined_call_operand.vmem [shape: f32[2,128], index: 0, kind: input, shape index: {}]
  %s1 = inlined_call_operand.vmem [shape: f32[2,8], index: 1, kind: input, shape index: {}]
  %s2 = inlined_call_operand.vmem [shape: bf16[128,452], index: 2, kind: input, shape index: {}]
  %s3 = inlined_call_operand.vmem [shape: f32[1,452], index: 3, kind: input, shape index: {}]
  %s4 = inlined_call_operand.vmem [shape: bf16[452,224], index: 4, kind: input, shape index: {}]
  %s5 = inlined_call_operand.vmem [shape: bf16[452,224], index: 5, kind: input, shape index: {}]
  %s6 = inlined_call_operand.vmem [shape: bf16[224,328], index: 6, kind: input, shape index: {}]
  %s7 = inlined_call_operand.vmem [shape: f32[1,328], index: 7, kind: input, shape index: {}]
  %s8 = inlined_call_operand.vmem [shape: bf16[328,160], index: 8, kind: input, shape index: {}]
  %s9 = inlined_call_operand.vmem [shape: bf16[328,160], index: 9, kind: input, shape index: {}]
  %s10 = inlined_call_operand.vmem [shape: bf16[160,32], index: 10, kind: input, shape index: {}]
  %s11 = inlined_call_operand.vmem [shape: f32[1,32], index: 11, kind: input, shape index: {}]
  %s12 = inlined_call_operand.vmem [shape: bf16[32,32], index: 12, kind: input, shape index: {}]
  %s13 = inlined_call_operand.vmem [shape: f32[1,32], index: 13, kind: input, shape index: {}]
  %s14 = inlined_call_operand.vmem [shape: bf16[32,16], index: 14, kind: input, shape index: {}]
  %s15 = inlined_call_operand.vmem [shape: bf16[8,16], index: 15, kind: input, shape index: {}]
  %s16 = inlined_call_operand.vmem [shape: f32[1,16], index: 16, kind: input, shape index: {}]
  %s17 = inlined_call_operand.vmem [shape: bf16[16,16], index: 17, kind: input, shape index: {}]
  %s18 = inlined_call_operand.vmem [shape: f32[1,16], index: 18, kind: input, shape index: {}]
  %s19 = inlined_call_operand.vmem [shape: f32[1,16], index: 19, kind: input, shape index: {}]
  %s20 = inlined_call_operand.<no memory space> [shape: f32[1,1], index: 20, kind: input, shape index: {}]
  %s21 = inlined_call_operand.vmem [shape: f32[2,1], index: 21, kind: output, shape index: {}]
  %s22 = sld [smem:[#allocation0]]
  $region94: #{cnn_dual_inputs_forward.1} parent=0
    _
  %s24 = ssub.s32 1, %s22
  %s25 = scalar_select 0, %s24, %s22
  %v26 = vstv %s20
  %27 = vst [vmem:[#allocation2] sm:$0x1] %v26
  // Predicated region
  $region2: #{cnn_dual_inputs_forward.1} parent=0 // pred_check
    _
  $region3: #{cnn_dual_inputs_forward.1} parent=0 // pred_check_branch
    %29 = sbr.rel (0) target = $region5
  $region4: #{cnn_dual_inputs_forward.1} parent=0 // pred_region
    _
  $region5: #{cnn_dual_inputs_forward.1} parent=0 // pred_fallthru
    _
  // Predicated region
  $region6: #{cnn_dual_inputs_forward.1} parent=0 // pred_check
    _
  $region7: #{cnn_dual_inputs_forward.1} parent=0 // pred_check_branch
    %31 = sbr.rel (0) target = $region9
  $region8: #{cnn_dual_inputs_forward.1} parent=0 // pred_region
    _
  $region9: #{cnn_dual_inputs_forward.1} parent=0 // pred_fallthru
    _
  // Predicated region
  $region10: #{cnn_dual_inputs_forward.1} parent=0 // pred_check
    _
  $region11: #{cnn_dual_inputs_forward.1} parent=0 // pred_check_branch
    %33 = sbr.rel (0) target = $region13
  $region12: #{cnn_dual_inputs_forward.1} parent=0 // pred_region
    _
  $region13: #{cnn_dual_inputs_forward.1} parent=0 // pred_fallthru
    _
  // Predicated region
  $region14: #{cnn_dual_inputs_forward.1} parent=0 // pred_check
    _
  $region15: #{cnn_dual_inputs_forward.1} parent=0 // pred_check_branch
    %35 = sbr.rel (0) target = $region17
  $region16: #{cnn_dual_inputs_forward.1} parent=0 // pred_region
    _
  $region17: #{cnn_dual_inputs_forward.1} parent=0 // pred_fallthru
    _
  // Predicated region
  $region18: #{cnn_dual_inputs_forward.1} parent=0 // pred_check
    _
  $region19: #{cnn_dual_inputs_forward.1} parent=0 // pred_check_branch
    %37 = sbr.rel (0) target = $region21
  $region20: #{cnn_dual_inputs_forward.1} parent=0 // pred_region
    _
  $region21: #{cnn_dual_inputs_forward.1} parent=0 // pred_fallthru
    _
  // Predicated region
  $region22: #{cnn_dual_inputs_forward.1} parent=0 // pred_check
    _
  $region23: #{cnn_dual_inputs_forward.1} parent=0 // pred_check_branch
    %39 = sbr.rel (0) target = $region25
  $region24: #{cnn_dual_inputs_forward.1} parent=0 // pred_region
    _
  $region25: #{cnn_dual_inputs_forward.1} parent=0 // pred_fallthru
    _
  // Predicated region
  $region26: #{cnn_dual_inputs_forward.1} parent=0 // pred_check
    _
  $region27: #{cnn_dual_inputs_forward.1} parent=0 // pred_check_branch
    %41 = sbr.rel (0) target = $region29
  $region28: #{cnn_dual_inputs_forward.1} parent=0 // pred_region
    _
  $region29: #{cnn_dual_inputs_forward.1} parent=0 // pred_fallthru
    _
  // Predicated region
  $region30: #{cnn_dual_inputs_forward.1} parent=0 // pred_check
    _
  $region31: #{cnn_dual_inputs_forward.1} parent=0 // pred_check_branch
    %43 = sbr.rel (0) target = $region33
  $region32: #{cnn_dual_inputs_forward.1} parent=0 // pred_region
    _
  $region33: #{cnn_dual_inputs_forward.1} parent=0 // pred_fallthru
    _
  // Predicated region
  $region34: #{cnn_dual_inputs_forward.1} parent=0 // pred_check
    _
  $region35: #{cnn_dual_inputs_forward.1} parent=0 // pred_check_branch
    %45 = sbr.rel (0) target = $region37
  $region36: #{cnn_dual_inputs_forward.1} parent=0 // pred_region
    _
  $region37: #{cnn_dual_inputs_forward.1} parent=0 // pred_fallthru
    _
  // Predicated region
  $region38: #{cnn_dual_inputs_forward.1} parent=0 // pred_check
    _
  $region39: #{cnn_dual_inputs_forward.1} parent=0 // pred_check_branch
    %47 = sbr.rel (0) target = $region41
  $region40: #{cnn_dual_inputs_forward.1} parent=0 // pred_region
    _
  $region41: #{cnn_dual_inputs_forward.1} parent=0 // pred_fallthru
    _
  // Predicated region
  $region42: #{cnn_dual_inputs_forward.1} parent=0 // pred_check
    _
  $region43: #{cnn_dual_inputs_forward.1} parent=0 // pred_check_branch
    %49 = sbr.rel (0) target = $region45
  $region44: #{cnn_dual_inputs_forward.1} parent=0 // pred_region
    _
  $region45: #{cnn_dual_inputs_forward.1} parent=0 // pred_fallthru
    _
  // Predicated region
  $region46: #{cnn_dual_inputs_forward.1} parent=0 // pred_check
    _
  $region47: #{cnn_dual_inputs_forward.1} parent=0 // pred_check_branch
    %51 = sbr.rel (0) target = $region49
  $region48: #{cnn_dual_inputs_forward.1} parent=0 // pred_region
    _
  $region49: #{cnn_dual_inputs_forward.1} parent=0 // pred_fallthru
    _
  // Predicated region
  $region50: #{cnn_dual_inputs_forward.1} parent=0 // pred_check
    _
  $region51: #{cnn_dual_inputs_forward.1} parent=0 // pred_check_branch
    %53 = sbr.rel (0) target = $region53
  $region52: #{cnn_dual_inputs_forward.1} parent=0 // pred_region
    _
  $region53: #{cnn_dual_inputs_forward.1} parent=0 // pred_fallthru
    _
  // Predicated region
  $region54: #{cnn_dual_inputs_forward.1} parent=0 // pred_check
    _
  $region55: #{cnn_dual_inputs_forward.1} parent=0 // pred_check_branch
    %55 = sbr.rel (0) target = $region57
  $region56: #{cnn_dual_inputs_forward.1} parent=0 // pred_region
    _
  $region57: #{cnn_dual_inputs_forward.1} parent=0 // pred_fallthru
    _
  // Predicated region
  $region58: #{cnn_dual_inputs_forward.1} parent=0 // pred_check
    _
  $region59: #{cnn_dual_inputs_forward.1} parent=0 // pred_check_branch
    %57 = sbr.rel (0) target = $region61
  $region60: #{cnn_dual_inputs_forward.1} parent=0 // pred_region
    _
  $region61: #{cnn_dual_inputs_forward.1} parent=0 // pred_fallthru
    _
  // Predicated region
  $region62: #{cnn_dual_inputs_forward.1} parent=0 // pred_check
    _
  $region63: #{cnn_dual_inputs_forward.1} parent=0 // pred_check_branch
    %59 = sbr.rel (0) target = $region65
  $region64: #{cnn_dual_inputs_forward.1} parent=0 // pred_region
    _
  $region65: #{cnn_dual_inputs_forward.1} parent=0 // pred_fallthru
    _
  // Predicated region
  $region66: #{cnn_dual_inputs_forward.1} parent=0 // pred_check
    _
  $region67: #{cnn_dual_inputs_forward.1} parent=0 // pred_check_branch
    %61 = sbr.rel (0) target = $region69
  $region68: #{cnn_dual_inputs_forward.1} parent=0 // pred_region
    _
  $region69: #{cnn_dual_inputs_forward.1} parent=0 // pred_fallthru
    _
  // Predicated region
  $region70: #{cnn_dual_inputs_forward.1} parent=0 // pred_check
    _
  $region71: #{cnn_dual_inputs_forward.1} parent=0 // pred_check_branch
    %63 = sbr.rel (0) target = $region73
  $region72: #{cnn_dual_inputs_forward.1} parent=0 // pred_region
    _
  $region73: #{cnn_dual_inputs_forward.1} parent=0 // pred_fallthru
    _
  // Predicated region
  $region74: #{cnn_dual_inputs_forward.1} parent=0 // pred_check
    _
  $region75: #{cnn_dual_inputs_forward.1} parent=0 // pred_check_branch
    %65 = sbr.rel (0) target = $region77
  $region76: #{cnn_dual_inputs_forward.1} parent=0 // pred_region
    _
  $region77: #{cnn_dual_inputs_forward.1} parent=0 // pred_fallthru
    _
  // Predicated region
  $region78: #{cnn_dual_inputs_forward.1} parent=0 // pred_check
    _
  $region79: #{cnn_dual_inputs_forward.1} parent=0 // pred_check_branch
    %67 = sbr.rel (0) target = $region81
  $region80: #{cnn_dual_inputs_forward.1} parent=0 // pred_region
    _
  $region81: #{cnn_dual_inputs_forward.1} parent=0 // pred_fallthru
    _
  // Predicated region
  $region82: #{cnn_dual_inputs_forward.1} parent=0 // pred_check
    _
  $region83: #{cnn_dual_inputs_forward.1} parent=0 // pred_check_branch
    %69 = sbr.rel (0) target = $region85
  $region84: #{cnn_dual_inputs_forward.1} parent=0 // pred_region
    _
  $region85: #{cnn_dual_inputs_forward.1} parent=0 // pred_fallthru
    _
  %v71 = vld [vmem:[%s0] sm:$0x3]
  %v72 = vpack.c.bf16 %v71, %v71
  %v73 = vld [vmem:[%s2] sm:$0xff]
  %v74 = vld [vmem:[%s2 + $0x8] sm:$0xff]
  %v75 = vld [vmem:[%s2 + $0x10] sm:$0xff]
  %v76 = vld [vmem:[%s2 + $0x18] sm:$0xff]
  %v77 = vld [vmem:[%s2 + $0x20] sm:$0xff]
  %v78 = vld [vmem:[%s2 + $0x28] sm:$0xff]
  %v79 = vld [vmem:[%s2 + $0x30] sm:$0xff]
  %v80 = vld [vmem:[%s2 + $0x38] sm:$0xff]
  %v81 = vld [vmem:[%s2 + $0x40] sm:$0xff]
  %v82 = vld [vmem:[%s2 + $0x48] sm:$0xff]
  %v83 = vld [vmem:[%s2 + $0x50] sm:$0xff]
  %v84 = vld [vmem:[%s2 + $0x58] sm:$0xff]
  %v85 = vld [vmem:[%s2 + $0x60] sm:$0xff]
  %v86 = vld [vmem:[%s2 + $0x68] sm:$0xff]
  %v87 = vld [vmem:[%s2 + $0x70] sm:$0xff]
  %v88 = vld [vmem:[%s2 + $0x78] sm:$0xff]
  %v89 = vld [vmem:[%s2 + $0x80] sm:$0xff]
  %v90 = vld [vmem:[%s2 + $0x88] sm:$0xff]
  %v91 = vld [vmem:[%s2 + $0x90] sm:$0xff]
  %v92 = vld [vmem:[%s2 + $0x98] sm:$0xff]
  %v93 = vld [vmem:[%s2 + $0xa0] sm:$0xff]
  %v94 = vld [vmem:[%s2 + $0xa8] sm:$0xff]
  %v95 = vld [vmem:[%s2 + $0xb0] sm:$0xff]
  %v96 = vld [vmem:[%s2 + $0xb8] sm:$0xff]
  %v97 = vld [vmem:[%s2 + $0xc0] sm:$0xff]
  %v98 = vld [vmem:[%s2 + $0xc8] sm:$0xff]
  %v99 = vld [vmem:[%s2 + $0xd0] sm:$0xff]
  %v100 = vld [vmem:[%s2 + $0xd8] sm:$0xff]
  %v101 = vld [vmem:[%s2 + $0xe0] sm:$0xff]
  %v102 = vld [vmem:[%s2 + $0xe8] sm:$0xff]
  %v103 = vld [vmem:[%s2 + $0xf0] sm:$0xff]
  %v104 = vld [vmem:[%s2 + $0xf8] sm:$0xff]
  %v105 = vld [vmem:[%s3] sm:$0xf]
  %v107 = vlaneseq
  %v108 = vshrl.u32 %v107, 7
  %v109 = vsub.s32 0, %v108
  %v110 = vrot.slane %v105, %v109
  %v111 = vlaneseq
  %v112 = vshrl.u32 %v111, 7
  %v113 = vsub.s32 1, %v112
  %v114 = vrot.slane %v105, %v113
  %v115 = vlaneseq
  %v116 = vshrl.u32 %v115, 7
  %v117 = vsub.s32 2, %v116
  %v118 = vrot.slane %v105, %v117
  %v119 = vlaneseq
  %v120 = vshrl.u32 %v119, 7
  %v121 = vsub.s32 3, %v120
  %v122 = vrot.slane %v105, %v121
  %v159 = vunpack.c.l.b16 %v73
  %v160 = vunpack.c.h.b16 %v73
  %v161 = vunpack.c.l.b16 %v74
  %v162 = vunpack.c.h.b16 %v74
  %v163 = vunpack.c.l.b16 %v75
  %v164 = vunpack.c.h.b16 %v75
  %v165 = vunpack.c.l.b16 %v76
  %v166 = vunpack.c.h.b16 %v76
  %v167 = vunpack.c.l.b16 %v77
  %v168 = vunpack.c.h.b16 %v77
  %v169 = vunpack.c.l.b16 %v78
  %v170 = vunpack.c.h.b16 %v78
  %v171 = vunpack.c.l.b16 %v79
  %v172 = vunpack.c.h.b16 %v79
  %v173 = vunpack.c.l.b16 %v80
  %v174 = vunpack.c.h.b16 %v80
  %v175 = vunpack.c.l.b16 %v81
  %v176 = vunpack.c.h.b16 %v81
  %v177 = vunpack.c.l.b16 %v82
  %v178 = vunpack.c.h.b16 %v82
  %v179 = vunpack.c.l.b16 %v83
  %v180 = vunpack.c.h.b16 %v83
  %v181 = vunpack.c.l.b16 %v84
  %v182 = vunpack.c.h.b16 %v84
  %v183 = vunpack.c.l.b16 %v85
  %v184 = vunpack.c.h.b16 %v85
  %v185 = vunpack.c.l.b16 %v86
  %v186 = vunpack.c.h.b16 %v86
  %v187 = vunpack.c.l.b16 %v87
  %v188 = vunpack.c.h.b16 %v87
  %v189 = vunpack.c.l.b16 %v88
  %v190 = vunpack.c.h.b16 %v88
  %v191 = vunpack.c.l.b16 %v89
  %v192 = vunpack.c.h.b16 %v89
  %v193 = vunpack.c.l.b16 %v90
  %v194 = vunpack.c.h.b16 %v90
  %v195 = vunpack.c.l.b16 %v91
  %v196 = vunpack.c.h.b16 %v91
  %v197 = vunpack.c.l.b16 %v92
  %v198 = vunpack.c.h.b16 %v92
  %v199 = vunpack.c.l.b16 %v93
  %v200 = vunpack.c.h.b16 %v93
  %v201 = vunpack.c.l.b16 %v94
  %v202 = vunpack.c.h.b16 %v94
  %v203 = vunpack.c.l.b16 %v95
  %v204 = vunpack.c.h.b16 %v95
  %v205 = vunpack.c.l.b16 %v96
  %v206 = vunpack.c.h.b16 %v96
  %v207 = vunpack.c.l.b16 %v97
  %v208 = vunpack.c.h.b16 %v97
  %v209 = vunpack.c.l.b16 %v98
  %v210 = vunpack.c.h.b16 %v98
  %v211 = vunpack.c.l.b16 %v99
  %v212 = vunpack.c.h.b16 %v99
  %v213 = vunpack.c.l.b16 %v100
  %v214 = vunpack.c.h.b16 %v100
  %v215 = vunpack.c.l.b16 %v101
  %v216 = vunpack.c.h.b16 %v101
  %v217 = vunpack.c.l.b16 %v102
  %v218 = vunpack.c.h.b16 %v102
  %v219 = vunpack.c.l.b16 %v103
  %v220 = vunpack.c.h.b16 %v103
  %v221 = vunpack.c.l.b16 %v104
  %v222 = vunpack.c.h.b16 %v104
  %v223 = vpack.c.b16 %v163, %v159
  %v224 = vpack.c.b16 %v164, %v160
  %v225 = vpack.c.b16 %v165, %v161
  %v226 = vpack.c.b16 %v166, %v162
  %v227 = vpack.c.b16 %v171, %v167
  %v228 = vpack.c.b16 %v172, %v168
  %v229 = vpack.c.b16 %v173, %v169
  %v230 = vpack.c.b16 %v174, %v170
  %v231 = vpack.c.b16 %v179, %v175
  %v232 = vpack.c.b16 %v180, %v176
  %v233 = vpack.c.b16 %v181, %v177
  %v234 = vpack.c.b16 %v182, %v178
  %v235 = vpack.c.b16 %v187, %v183
  %v236 = vpack.c.b16 %v188, %v184
  %v237 = vpack.c.b16 %v189, %v185
  %v238 = vpack.c.b16 %v190, %v186
  %v239 = vpack.c.b16 %v195, %v191
  %v240 = vpack.c.b16 %v196, %v192
  %v241 = vpack.c.b16 %v197, %v193
  %v242 = vpack.c.b16 %v198, %v194
  %v243 = vpack.c.b16 %v203, %v199
  %v244 = vpack.c.b16 %v204, %v200
  %v245 = vpack.c.b16 %v205, %v201
  %v246 = vpack.c.b16 %v206, %v202
  %v247 = vpack.c.b16 %v211, %v207
  %v248 = vpack.c.b16 %v212, %v208
  %v249 = vpack.c.b16 %v213, %v209
  %v250 = vpack.c.b16 %v214, %v210
  %v251 = vpack.c.b16 %v219, %v215
  %v252 = vpack.c.b16 %v220, %v216
  %v253 = vpack.c.b16 %v221, %v217
  %v254 = vpack.c.b16 %v222, %v218
  %287 = vmatprep.subr.bf16.mxu0 %v224
  %288 = vmatpush1.bf16.msra.mxu0 %v223
  %289 = vmatprep.subr.bf16.mxu0 %v228
  %290 = vmatpush1.bf16.msra.mxu0 %v227
  %291 = vmatprep.subr.bf16.mxu0 %v232
  %292 = vmatpush1.bf16.msra.mxu0 %v231
  %293 = vmatprep.subr.bf16.mxu0 %v236
  %294 = vmatpush1.bf16.msra.mxu0 %v235
  %295 = vmatprep.subr.bf16.mxu0 %v240
  %296 = vmatpush1.bf16.msra.mxu0 %v239
  %297 = vmatprep.subr.bf16.mxu0 %v244
  %298 = vmatpush1.bf16.msra.mxu0 %v243
  %299 = vmatprep.subr.bf16.mxu0 %v248
  %300 = vmatpush1.bf16.msra.mxu0 %v247
  %301 = vmatprep.subr.bf16.mxu0 %v252
  %302 = vmatpush1.bf16.msra.mxu0 %v251
  %303 = vmatprep.subr.bf16.mxu0 0
  %304 = vmatpush1.bf16.msra.mxu0 0
  %305 = vmatprep.subr.bf16.mxu0 0
  %306 = vmatpush1.bf16.msra.mxu0 0
  %307 = vmatprep.subr.bf16.mxu0 0
  %308 = vmatpush1.bf16.msra.mxu0 0
  %309 = vmatprep.subr.bf16.mxu0 0
  %310 = vmatpush1.bf16.msra.mxu0 0
  %311 = vmatprep.subr.bf16.mxu0 0
  %312 = vmatpush1.bf16.msra.mxu0 0
  %313 = vmatprep.subr.bf16.mxu0 0
  %314 = vmatpush1.bf16.msra.mxu0 0
  %315 = vmatprep.subr.bf16.mxu0 0
  %316 = vmatpush1.bf16.msra.mxu0 0
  %317 = vmatprep.subr.bf16.mxu0 0
  %318 = vmatpush1.bf16.msra.mxu0 0
  %319 = vmatprep.mubr.bf16.mxu0 0
  %320 = vmatmul.mubr.bf16.gmra.mrb[0].mxu0 %v72
  %v321 = vpop.f32.mrb[0].mxu0
  %v322 = vadd.f32 %v110, %v321
  %v323 = vpop.f32.mrb[0].mxu0
  %v324 = vadd.f32 %v114, %v323
  %v325 = vpop.f32.mrb[0].mxu0
  %v326 = vpop.f32.mrb[0].mxu0
  %327 = vdwg.mxu0
  %328 = vmatprep.subr.bf16.mxu0 %v226
  %329 = vmatpush1.bf16.msra.mxu0 %v225
  %330 = vmatprep.subr.bf16.mxu0 %v230
  %331 = vmatpush1.bf16.msra.mxu0 %v229
  %332 = vmatprep.subr.bf16.mxu0 %v234
  %333 = vmatpush1.bf16.msra.mxu0 %v233
  %334 = vmatprep.subr.bf16.mxu0 %v238
  %335 = vmatpush1.bf16.msra.mxu0 %v237
  %336 = vmatprep.subr.bf16.mxu0 %v242
  %337 = vmatpush1.bf16.msra.mxu0 %v241
  %338 = vmatprep.subr.bf16.mxu0 %v246
  %339 = vmatpush1.bf16.msra.mxu0 %v245
  %340 = vmatprep.subr.bf16.mxu0 %v250
  %341 = vmatpush1.bf16.msra.mxu0 %v249
  %342 = vmatprep.subr.bf16.mxu0 %v254
  %343 = vmatpush1.bf16.msra.mxu0 %v253
  %344 = vmatprep.subr.bf16.mxu0 0
  %345 = vmatpush1.bf16.msra.mxu0 0
  %346 = vmatprep.subr.bf16.mxu0 0
  %347 = vmatpush1.bf16.msra.mxu0 0
  %348 = vmatprep.subr.bf16.mxu0 0
  %349 = vmatpush1.bf16.msra.mxu0 0
  %350 = vmatprep.subr.bf16.mxu0 0
  %351 = vmatpush1.bf16.msra.mxu0 0
  %352 = vmatprep.subr.bf16.mxu0 0
  %353 = vmatpush1.bf16.msra.mxu0 0
  %354 = vmatprep.subr.bf16.mxu0 0
  %355 = vmatpush1.bf16.msra.mxu0 0
  %356 = vmatprep.subr.bf16.mxu0 0
  %357 = vmatpush1.bf16.msra.mxu0 0
  %358 = vmatprep.subr.bf16.mxu0 0
  %359 = vmatpush1.bf16.msra.mxu0 0
  %360 = vmatprep.mubr.bf16.mxu0 0
  %361 = vmatmul.mubr.bf16.gmra.mrb[0].mxu0 %v72
  %v362 = vpop.f32.mrb[0].mxu0
  %v363 = vadd.f32 %v118, %v362
  %v364 = vpop.f32.mrb[0].mxu0
  %v365 = vadd.f32 %v122, %v364
  %v366 = vpop.f32.mrb[0].mxu0
  %v367 = vpop.f32.mrb[0].mxu0
  %368 = vdwg.mxu0
  %v369 = vmax.f32 %v322, 0.0
  %v370 = vmax.f32 %v324, 0.0
  %v371 = vmax.f32 %v363, 0.0
  %v372 = vmax.f32 %v365, 0.0
  %v373 = vpack.c.bf16 %v369, %v369
  %v374 = vpack.c.bf16 %v370, %v370
  %v375 = vpack.c.bf16 %v371, %v371
  %v376 = vpack.c.bf16 %v372, %v372
  %v377 = vld [vmem:[%s4] sm:$0xff]
  %v378 = vld [vmem:[%s4 + $0x8] sm:$0xff]
  %v379 = vld [vmem:[%s4 + $0x10] sm:$0xff]
  %v380 = vld [vmem:[%s4 + $0x18] sm:$0xff]
  %v381 = vld [vmem:[%s4 + $0x20] sm:$0xff]
  %v382 = vld [vmem:[%s4 + $0x28] sm:$0xff]
  %v383 = vld [vmem:[%s4 + $0x30] sm:$0xff]
  %v384 = vld [vmem:[%s4 + $0x38] sm:$0xff]
  %v385 = vld [vmem:[%s4 + $0x40] sm:$0xff]
  %v386 = vld [vmem:[%s4 + $0x48] sm:$0xff]
  %v387 = vld [vmem:[%s4 + $0x50] sm:$0xff]
  %v388 = vld [vmem:[%s4 + $0x58] sm:$0xff]
  %v389 = vld [vmem:[%s4 + $0x60] sm:$0xff]
  %v390 = vld [vmem:[%s4 + $0x68] sm:$0xff]
  %v391 = vld [vmem:[%s4 + $0x70] sm:$0xff]
  %v392 = vld [vmem:[%s4 + $0x78] sm:$0xff]
  %v393 = vld [vmem:[%s4 + $0x80] sm:$0xff]
  %v394 = vld [vmem:[%s4 + $0x88] sm:$0xff]
  %v395 = vld [vmem:[%s4 + $0x90] sm:$0xff]
  %v396 = vld [vmem:[%s4 + $0x98] sm:$0xff]
  %v397 = vld [vmem:[%s4 + $0xa0] sm:$0xff]
  %v398 = vld [vmem:[%s4 + $0xa8] sm:$0xff]
  %v399 = vld [vmem:[%s4 + $0xb0] sm:$0xff]
  %v400 = vld [vmem:[%s4 + $0xb8] sm:$0xff]
  %v401 = vld [vmem:[%s4 + $0xc0] sm:$0xff]
  %v402 = vld [vmem:[%s4 + $0xc8] sm:$0xff]
  %v403 = vld [vmem:[%s4 + $0xd0] sm:$0xff]
  %v404 = vld [vmem:[%s4 + $0xd8] sm:$0xff]
  %v405 = vld [vmem:[%s4 + $0xe0] sm:$0xff]
  %v406 = vld [vmem:[%s4 + $0xe8] sm:$0xff]
  %v407 = vld [vmem:[%s4 + $0xf0] sm:$0xff]
  %v408 = vld [vmem:[%s4 + $0xf8] sm:$0xff]
  %v409 = vld [vmem:[%s4 + $0x100] sm:$0xff]
  %v410 = vld [vmem:[%s4 + $0x108] sm:$0xff]
  %v411 = vld [vmem:[%s4 + $0x110] sm:$0xff]
  %v412 = vld [vmem:[%s4 + $0x118] sm:$0xff]
  %v413 = vld [vmem:[%s4 + $0x120] sm:$0xff]
  %v414 = vld [vmem:[%s4 + $0x128] sm:$0xff]
  %v415 = vld [vmem:[%s4 + $0x130] sm:$0xff]
  %v416 = vld [vmem:[%s4 + $0x138] sm:$0xff]
  %v417 = vld [vmem:[%s4 + $0x140] sm:$0xff]
  %v418 = vld [vmem:[%s4 + $0x148] sm:$0xff]
  %v419 = vld [vmem:[%s4 + $0x150] sm:$0xff]
  %v420 = vld [vmem:[%s4 + $0x158] sm:$0xff]
  %v421 = vld [vmem:[%s4 + $0x160] sm:$0xff]
  %v422 = vld [vmem:[%s4 + $0x168] sm:$0xff]
  %v423 = vld [vmem:[%s4 + $0x170] sm:$0xff]
  %v424 = vld [vmem:[%s4 + $0x178] sm:$0xff]
  %v425 = vld [vmem:[%s4 + $0x180] sm:$0xff]
  %v426 = vld [vmem:[%s4 + $0x188] sm:$0xff]
  %v427 = vld [vmem:[%s4 + $0x190] sm:$0xff]
  %v428 = vld [vmem:[%s4 + $0x198] sm:$0xff]
  %v429 = vld [vmem:[%s4 + $0x1a0] sm:$0xff]
  %v430 = vld [vmem:[%s4 + $0x1a8] sm:$0xff]
  %v431 = vld [vmem:[%s4 + $0x1b0] sm:$0xff]
  %v432 = vld [vmem:[%s4 + $0x1b8] sm:$0xff]
  %v433 = vld [vmem:[%s4 + $0x1c0] sm:$0x33]
  %v491 = vunpack.c.l.b16 %v377
  %v492 = vunpack.c.h.b16 %v377
  %v493 = vunpack.c.l.b16 %v378
  %v494 = vunpack.c.h.b16 %v378
  %v495 = vunpack.c.l.b16 %v379
  %v496 = vunpack.c.h.b16 %v379
  %v497 = vunpack.c.l.b16 %v380
  %v498 = vunpack.c.h.b16 %v380
  %v499 = vunpack.c.l.b16 %v381
  %v500 = vunpack.c.h.b16 %v381
  %v501 = vunpack.c.l.b16 %v382
  %v502 = vunpack.c.h.b16 %v382
  %v503 = vunpack.c.l.b16 %v383
  %v504 = vunpack.c.h.b16 %v383
  %v505 = vunpack.c.l.b16 %v384
  %v506 = vunpack.c.h.b16 %v384
  %v507 = vunpack.c.l.b16 %v385
  %v508 = vunpack.c.h.b16 %v385
  %v509 = vunpack.c.l.b16 %v386
  %v510 = vunpack.c.h.b16 %v386
  %v511 = vunpack.c.l.b16 %v387
  %v512 = vunpack.c.h.b16 %v387
  %v513 = vunpack.c.l.b16 %v388
  %v514 = vunpack.c.h.b16 %v388
  %v515 = vunpack.c.l.b16 %v389
  %v516 = vunpack.c.h.b16 %v389
  %v517 = vunpack.c.l.b16 %v390
  %v518 = vunpack.c.h.b16 %v390
  %v519 = vunpack.c.l.b16 %v391
  %v520 = vunpack.c.h.b16 %v391
  %v521 = vunpack.c.l.b16 %v392
  %v522 = vunpack.c.h.b16 %v392
  %v523 = vunpack.c.l.b16 %v393
  %v524 = vunpack.c.h.b16 %v393
  %v525 = vunpack.c.l.b16 %v394
  %v526 = vunpack.c.h.b16 %v394
  %v527 = vunpack.c.l.b16 %v395
  %v528 = vunpack.c.h.b16 %v395
  %v529 = vunpack.c.l.b16 %v396
  %v530 = vunpack.c.h.b16 %v396
  %v531 = vunpack.c.l.b16 %v397
  %v532 = vunpack.c.h.b16 %v397
  %v533 = vunpack.c.l.b16 %v398
  %v534 = vunpack.c.h.b16 %v398
  %v535 = vunpack.c.l.b16 %v399
  %v536 = vunpack.c.h.b16 %v399
  %v537 = vunpack.c.l.b16 %v400
  %v538 = vunpack.c.h.b16 %v400
  %v539 = vunpack.c.l.b16 %v401
  %v540 = vunpack.c.h.b16 %v401
  %v541 = vunpack.c.l.b16 %v402
  %v542 = vunpack.c.h.b16 %v402
  %v543 = vunpack.c.l.b16 %v403
  %v544 = vunpack.c.h.b16 %v403
  %v545 = vunpack.c.l.b16 %v404
  %v546 = vunpack.c.h.b16 %v404
  %v547 = vunpack.c.l.b16 %v405
  %v548 = vunpack.c.h.b16 %v405
  %v549 = vunpack.c.l.b16 %v406
  %v550 = vunpack.c.h.b16 %v406
  %v551 = vunpack.c.l.b16 %v407
  %v552 = vunpack.c.h.b16 %v407
  %v553 = vunpack.c.l.b16 %v408
  %v554 = vunpack.c.h.b16 %v408
  %v555 = vunpack.c.l.b16 %v409
  %v556 = vunpack.c.h.b16 %v409
  %v557 = vunpack.c.l.b16 %v410
  %v558 = vunpack.c.h.b16 %v410
  %v559 = vunpack.c.l.b16 %v411
  %v560 = vunpack.c.h.b16 %v411
  %v561 = vunpack.c.l.b16 %v412
  %v562 = vunpack.c.h.b16 %v412
  %v563 = vunpack.c.l.b16 %v413
  %v564 = vunpack.c.h.b16 %v413
  %v565 = vunpack.c.l.b16 %v414
  %v566 = vunpack.c.h.b16 %v414
  %v567 = vunpack.c.l.b16 %v415
  %v568 = vunpack.c.h.b16 %v415
  %v569 = vunpack.c.l.b16 %v416
  %v570 = vunpack.c.h.b16 %v416
  %v571 = vunpack.c.l.b16 %v417
  %v572 = vunpack.c.h.b16 %v417
  %v573 = vunpack.c.l.b16 %v418
  %v574 = vunpack.c.h.b16 %v418
  %v575 = vunpack.c.l.b16 %v419
  %v576 = vunpack.c.h.b16 %v419
  %v577 = vunpack.c.l.b16 %v420
  %v578 = vunpack.c.h.b16 %v420
  %v579 = vunpack.c.l.b16 %v421
  %v580 = vunpack.c.h.b16 %v421
  %v581 = vunpack.c.l.b16 %v422
  %v582 = vunpack.c.h.b16 %v422
  %v583 = vunpack.c.l.b16 %v423
  %v584 = vunpack.c.h.b16 %v423
  %v585 = vunpack.c.l.b16 %v424
  %v586 = vunpack.c.h.b16 %v424
  %v587 = vunpack.c.l.b16 %v425
  %v588 = vunpack.c.h.b16 %v425
  %v589 = vunpack.c.l.b16 %v426
  %v590 = vunpack.c.h.b16 %v426
  %v591 = vunpack.c.l.b16 %v427
  %v592 = vunpack.c.h.b16 %v427
  %v593 = vunpack.c.l.b16 %v428
  %v594 = vunpack.c.h.b16 %v428
  %v595 = vunpack.c.l.b16 %v429
  %v596 = vunpack.c.h.b16 %v429
  %v597 = vunpack.c.l.b16 %v430
  %v598 = vunpack.c.h.b16 %v430
  %v599 = vunpack.c.l.b16 %v431
  %v600 = vunpack.c.h.b16 %v431
  %v601 = vunpack.c.l.b16 %v432
  %v602 = vunpack.c.h.b16 %v432
  %v603 = vunpack.c.l.b16 %v433
  %v604 = vunpack.c.h.b16 %v433
  %v605 = vpack.c.b16 %v493, %v491
  %v606 = vpack.c.b16 %v494, %v492
  %v607 = vpack.c.b16 %v497, %v495
  %v608 = vpack.c.b16 %v498, %v496
  %v609 = vpack.c.b16 %v501, %v499
  %v610 = vpack.c.b16 %v502, %v500
  %v611 = vpack.c.b16 %v505, %v503
  %v612 = vpack.c.b16 %v506, %v504
  %v613 = vpack.c.b16 %v509, %v507
  %v614 = vpack.c.b16 %v510, %v508
  %v615 = vpack.c.b16 %v513, %v511
  %v616 = vpack.c.b16 %v514, %v512
  %v617 = vpack.c.b16 %v517, %v515
  %v618 = vpack.c.b16 %v518, %v516
  %v619 = vpack.c.b16 %v521, %v519
  %v620 = vpack.c.b16 %v522, %v520
  %v621 = vpack.c.b16 %v525, %v523
  %v622 = vpack.c.b16 %v526, %v524
  %v623 = vpack.c.b16 %v529, %v527
  %v624 = vpack.c.b16 %v530, %v528
  %v625 = vpack.c.b16 %v533, %v531
  %v626 = vpack.c.b16 %v534, %v532
  %v627 = vpack.c.b16 %v537, %v535
  %v628 = vpack.c.b16 %v538, %v536
  %v629 = vpack.c.b16 %v541, %v539
  %v630 = vpack.c.b16 %v542, %v540
  %v631 = vpack.c.b16 %v545, %v543
  %v632 = vpack.c.b16 %v546, %v544
  %v633 = vpack.c.b16 %v549, %v547
  %v634 = vpack.c.b16 %v550, %v548
  %v635 = vpack.c.b16 %v553, %v551
  %v636 = vpack.c.b16 %v554, %v552
  %v637 = vpack.c.b16 %v557, %v555
  %v638 = vpack.c.b16 %v558, %v556
  %v639 = vpack.c.b16 %v561, %v559
  %v640 = vpack.c.b16 %v562, %v560
  %v641 = vpack.c.b16 %v565, %v563
  %v642 = vpack.c.b16 %v566, %v564
  %v643 = vpack.c.b16 %v569, %v567
  %v644 = vpack.c.b16 %v570, %v568
  %v645 = vpack.c.b16 %v573, %v571
  %v646 = vpack.c.b16 %v574, %v572
  %v647 = vpack.c.b16 %v577, %v575
  %v648 = vpack.c.b16 %v578, %v576
  %v649 = vpack.c.b16 %v581, %v579
  %v650 = vpack.c.b16 %v582, %v580
  %v651 = vpack.c.b16 %v585, %v583
  %v652 = vpack.c.b16 %v586, %v584
  %v653 = vpack.c.b16 %v589, %v587
  %v654 = vpack.c.b16 %v590, %v588
  %v655 = vpack.c.b16 %v593, %v591
  %v656 = vpack.c.b16 %v594, %v592
  %v657 = vpack.c.b16 %v597, %v595
  %v658 = vpack.c.b16 %v598, %v596
  %v659 = vpack.c.b16 %v601, %v599
  %v660 = vpack.c.b16 %v602, %v600
  %v661 = vpack.c.b16 %v603, %v603
  %v662 = vpack.c.b16 %v604, %v604
  %vm719 = vcmask 556032
  %v721 = vsel %vm719, %v376, 0
  %vm723 = vcmask 1041408
  %v725 = vsel %vm723, %v661, 0
  %v728 = vsel %vm723, %v662, 0
  %730 = vmatprep.subr.bf16.mxu0 %v606
  %731 = vmatpush1.bf16.msra.mxu0 %v605
  %732 = vmatprep.subr.bf16.mxu0 %v608
  %733 = vmatpush1.bf16.msra.mxu0 %v607
  %734 = vmatprep.subr.bf16.mxu0 %v610
  %735 = vmatpush1.bf16.msra.mxu0 %v609
  %736 = vmatprep.subr.bf16.mxu0 %v612
  %737 = vmatpush1.bf16.msra.mxu0 %v611
  %738 = vmatprep.subr.bf16.mxu0 %v614
  %739 = vmatpush1.bf16.msra.mxu0 %v613
  %740 = vmatprep.subr.bf16.mxu0 %v616
  %741 = vmatpush1.bf16.msra.mxu0 %v615
  %742 = vmatprep.subr.bf16.mxu0 %v618
  %743 = vmatpush1.bf16.msra.mxu0 %v617
  %744 = vmatprep.subr.bf16.mxu0 %v620
  %745 = vmatpush1.bf16.msra.mxu0 %v619
  %746 = vmatprep.subr.bf16.mxu0 %v622
  %747 = vmatpush1.bf16.msra.mxu0 %v621
  %748 = vmatprep.subr.bf16.mxu0 %v624
  %749 = vmatpush1.bf16.msra.mxu0 %v623
  %750 = vmatprep.subr.bf16.mxu0 %v626
  %751 = vmatpush1.bf16.msra.mxu0 %v625
  %752 = vmatprep.subr.bf16.mxu0 %v628
  %753 = vmatpush1.bf16.msra.mxu0 %v627
  %754 = vmatprep.subr.bf16.mxu0 %v630
  %755 = vmatpush1.bf16.msra.mxu0 %v629
  %756 = vmatprep.subr.bf16.mxu0 %v632
  %757 = vmatpush1.bf16.msra.mxu0 %v631
  %758 = vmatprep.subr.bf16.mxu0 %v634
  %759 = vmatpush1.bf16.msra.mxu0 %v633
  %760 = vmatprep.subr.bf16.mxu0 %v636
  %761 = vmatpush1.bf16.msra.mxu0 %v635
  %762 = vmatprep.mubr.bf16.mxu0 %v374
  %763 = vmatmul.mubr.bf16.gmra.mrb[0].mxu0 %v373
  %v764 = vpop.f32.mrb[0].mxu0
  %v765 = vadd.f32 0.0, %v764
  %v766 = vpop.f32.mrb[0].mxu0
  %v767 = vadd.f32 0.0, %v766
  %v768 = vpop.f32.mrb[0].mxu0
  %v769 = vpop.f32.mrb[0].mxu0
  %770 = vdwg.mxu0
  %771 = vmatprep.subr.bf16.mxu0 %v638
  %772 = vmatpush1.bf16.msra.mxu0 %v637
  %773 = vmatprep.subr.bf16.mxu0 %v640
  %774 = vmatpush1.bf16.msra.mxu0 %v639
  %775 = vmatprep.subr.bf16.mxu0 %v642
  %776 = vmatpush1.bf16.msra.mxu0 %v641
  %777 = vmatprep.subr.bf16.mxu0 %v644
  %778 = vmatpush1.bf16.msra.mxu0 %v643
  %779 = vmatprep.subr.bf16.mxu0 %v646
  %780 = vmatpush1.bf16.msra.mxu0 %v645
  %781 = vmatprep.subr.bf16.mxu0 %v648
  %782 = vmatpush1.bf16.msra.mxu0 %v647
  %783 = vmatprep.subr.bf16.mxu0 %v650
  %784 = vmatpush1.bf16.msra.mxu0 %v649
  %785 = vmatprep.subr.bf16.mxu0 %v652
  %786 = vmatpush1.bf16.msra.mxu0 %v651
  %787 = vmatprep.subr.bf16.mxu0 %v654
  %788 = vmatpush1.bf16.msra.mxu0 %v653
  %789 = vmatprep.subr.bf16.mxu0 %v656
  %790 = vmatpush1.bf16.msra.mxu0 %v655
  %791 = vmatprep.subr.bf16.mxu0 %v658
  %792 = vmatpush1.bf16.msra.mxu0 %v657
  %793 = vmatprep.subr.bf16.mxu0 %v660
  %794 = vmatpush1.bf16.msra.mxu0 %v659
  %795 = vmatprep.subr.bf16.mxu0 %v728
  %796 = vmatpush1.bf16.msra.mxu0 %v725
  %797 = vmatprep.subr.bf16.mxu0 0
  %798 = vmatpush1.bf16.msra.mxu0 0
  %799 = vmatprep.subr.bf16.mxu0 0
  %800 = vmatpush1.bf16.msra.mxu0 0
  %801 = vmatprep.subr.bf16.mxu0 0
  %802 = vmatpush1.bf16.msra.mxu0 0
  %803 = vmatprep.mubr.bf16.mxu0 %v721
  %804 = vmatmul.mubr.bf16.gmra.mrb[0].mxu0 %v375
  %v805 = vpop.f32.mrb[0].mxu0
  %v806 = vadd.f32 %v765, %v805
  %v807 = vpop.f32.mrb[0].mxu0
  %v808 = vadd.f32 %v767, %v807
  %v809 = vpop.f32.mrb[0].mxu0
  %v810 = vpop.f32.mrb[0].mxu0
  %811 = vdwg.mxu0
  %v812 = vld [vmem:[%s5] sm:$0xff]
  %v813 = vld [vmem:[%s5 + $0x8] sm:$0xff]
  %v814 = vld [vmem:[%s5 + $0x10] sm:$0xff]
  %v815 = vld [vmem:[%s5 + $0x18] sm:$0xff]
  %v816 = vld [vmem:[%s5 + $0x20] sm:$0xff]
  %v817 = vld [vmem:[%s5 + $0x28] sm:$0xff]
  %v818 = vld [vmem:[%s5 + $0x30] sm:$0xff]
  %v819 = vld [vmem:[%s5 + $0x38] sm:$0xff]
  %v820 = vld [vmem:[%s5 + $0x40] sm:$0xff]
  %v821 = vld [vmem:[%s5 + $0x48] sm:$0xff]
  %v822 = vld [vmem:[%s5 + $0x50] sm:$0xff]
  %v823 = vld [vmem:[%s5 + $0x58] sm:$0xff]
  %v824 = vld [vmem:[%s5 + $0x60] sm:$0xff]
  %v825 = vld [vmem:[%s5 + $0x68] sm:$0xff]
  %v826 = vld [vmem:[%s5 + $0x70] sm:$0xff]
  %v827 = vld [vmem:[%s5 + $0x78] sm:$0xff]
  %v828 = vld [vmem:[%s5 + $0x80] sm:$0xff]
  %v829 = vld [vmem:[%s5 + $0x88] sm:$0xff]
  %v830 = vld [vmem:[%s5 + $0x90] sm:$0xff]
  %v831 = vld [vmem:[%s5 + $0x98] sm:$0xff]
  %v832 = vld [vmem:[%s5 + $0xa0] sm:$0xff]
  %v833 = vld [vmem:[%s5 + $0xa8] sm:$0xff]
  %v834 = vld [vmem:[%s5 + $0xb0] sm:$0xff]
  %v835 = vld [vmem:[%s5 + $0xb8] sm:$0xff]
  %v836 = vld [vmem:[%s5 + $0xc0] sm:$0xff]
  %v837 = vld [vmem:[%s5 + $0xc8] sm:$0xff]
  %v838 = vld [vmem:[%s5 + $0xd0] sm:$0xff]
  %v839 = vld [vmem:[%s5 + $0xd8] sm:$0xff]
  %v840 = vld [vmem:[%s5 + $0xe0] sm:$0xff]
  %v841 = vld [vmem:[%s5 + $0xe8] sm:$0xff]
  %v842 = vld [vmem:[%s5 + $0xf0] sm:$0xff]
  %v843 = vld [vmem:[%s5 + $0xf8] sm:$0xff]
  %v844 = vld [vmem:[%s5 + $0x100] sm:$0xff]
  %v845 = vld [vmem:[%s5 + $0x108] sm:$0xff]
  %v846 = vld [vmem:[%s5 + $0x110] sm:$0xff]
  %v847 = vld [vmem:[%s5 + $0x118] sm:$0xff]
  %v848 = vld [vmem:[%s5 + $0x120] sm:$0xff]
  %v849 = vld [vmem:[%s5 + $0x128] sm:$0xff]
  %v850 = vld [vmem:[%s5 + $0x130] sm:$0xff]
  %v851 = vld [vmem:[%s5 + $0x138] sm:$0xff]
  %v852 = vld [vmem:[%s5 + $0x140] sm:$0xff]
  %v853 = vld [vmem:[%s5 + $0x148] sm:$0xff]
  %v854 = vld [vmem:[%s5 + $0x150] sm:$0xff]
  %v855 = vld [vmem:[%s5 + $0x158] sm:$0xff]
  %v856 = vld [vmem:[%s5 + $0x160] sm:$0xff]
  %v857 = vld [vmem:[%s5 + $0x168] sm:$0xff]
  %v858 = vld [vmem:[%s5 + $0x170] sm:$0xff]
  %v859 = vld [vmem:[%s5 + $0x178] sm:$0xff]
  %v860 = vld [vmem:[%s5 + $0x180] sm:$0xff]
  %v861 = vld [vmem:[%s5 + $0x188] sm:$0xff]
  %v862 = vld [vmem:[%s5 + $0x190] sm:$0xff]
  %v863 = vld [vmem:[%s5 + $0x198] sm:$0xff]
  %v864 = vld [vmem:[%s5 + $0x1a0] sm:$0xff]
  %v865 = vld [vmem:[%s5 + $0x1a8] sm:$0xff]
  %v866 = vld [vmem:[%s5 + $0x1b0] sm:$0xff]
  %v867 = vld [vmem:[%s5 + $0x1b8] sm:$0xff]
  %v868 = vld [vmem:[%s5 + $0x1c0] sm:$0x33]
  %v926 = vunpack.c.l.b16 %v812
  %v927 = vunpack.c.h.b16 %v812
  %v928 = vunpack.c.l.b16 %v813
  %v929 = vunpack.c.h.b16 %v813
  %v930 = vunpack.c.l.b16 %v814
  %v931 = vunpack.c.h.b16 %v814
  %v932 = vunpack.c.l.b16 %v815
  %v933 = vunpack.c.h.b16 %v815
  %v934 = vunpack.c.l.b16 %v816
  %v935 = vunpack.c.h.b16 %v816
  %v936 = vunpack.c.l.b16 %v817
  %v937 = vunpack.c.h.b16 %v817
  %v938 = vunpack.c.l.b16 %v818
  %v939 = vunpack.c.h.b16 %v818
  %v940 = vunpack.c.l.b16 %v819
  %v941 = vunpack.c.h.b16 %v819
  %v942 = vunpack.c.l.b16 %v820
  %v943 = vunpack.c.h.b16 %v820
  %v944 = vunpack.c.l.b16 %v821
  %v945 = vunpack.c.h.b16 %v821
  %v946 = vunpack.c.l.b16 %v822
  %v947 = vunpack.c.h.b16 %v822
  %v948 = vunpack.c.l.b16 %v823
  %v949 = vunpack.c.h.b16 %v823
  %v950 = vunpack.c.l.b16 %v824
  %v951 = vunpack.c.h.b16 %v824
  %v952 = vunpack.c.l.b16 %v825
  %v953 = vunpack.c.h.b16 %v825
  %v954 = vunpack.c.l.b16 %v826
  %v955 = vunpack.c.h.b16 %v826
  %v956 = vunpack.c.l.b16 %v827
  %v957 = vunpack.c.h.b16 %v827
  %v958 = vunpack.c.l.b16 %v828
  %v959 = vunpack.c.h.b16 %v828
  %v960 = vunpack.c.l.b16 %v829
  %v961 = vunpack.c.h.b16 %v829
  %v962 = vunpack.c.l.b16 %v830
  %v963 = vunpack.c.h.b16 %v830
  %v964 = vunpack.c.l.b16 %v831
  %v965 = vunpack.c.h.b16 %v831
  %v966 = vunpack.c.l.b16 %v832
  %v967 = vunpack.c.h.b16 %v832
  %v968 = vunpack.c.l.b16 %v833
  %v969 = vunpack.c.h.b16 %v833
  %v970 = vunpack.c.l.b16 %v834
  %v971 = vunpack.c.h.b16 %v834
  %v972 = vunpack.c.l.b16 %v835
  %v973 = vunpack.c.h.b16 %v835
  %v974 = vunpack.c.l.b16 %v836
  %v975 = vunpack.c.h.b16 %v836
  %v976 = vunpack.c.l.b16 %v837
  %v977 = vunpack.c.h.b16 %v837
  %v978 = vunpack.c.l.b16 %v838
  %v979 = vunpack.c.h.b16 %v838
  %v980 = vunpack.c.l.b16 %v839
  %v981 = vunpack.c.h.b16 %v839
  %v982 = vunpack.c.l.b16 %v840
  %v983 = vunpack.c.h.b16 %v840
  %v984 = vunpack.c.l.b16 %v841
  %v985 = vunpack.c.h.b16 %v841
  %v986 = vunpack.c.l.b16 %v842
  %v987 = vunpack.c.h.b16 %v842
  %v988 = vunpack.c.l.b16 %v843
  %v989 = vunpack.c.h.b16 %v843
  %v990 = vunpack.c.l.b16 %v844
  %v991 = vunpack.c.h.b16 %v844
  %v992 = vunpack.c.l.b16 %v845
  %v993 = vunpack.c.h.b16 %v845
  %v994 = vunpack.c.l.b16 %v846
  %v995 = vunpack.c.h.b16 %v846
  %v996 = vunpack.c.l.b16 %v847
  %v997 = vunpack.c.h.b16 %v847
  %v998 = vunpack.c.l.b16 %v848
  %v999 = vunpack.c.h.b16 %v848
  %v1000 = vunpack.c.l.b16 %v849
  %v1001 = vunpack.c.h.b16 %v849
  %v1002 = vunpack.c.l.b16 %v850
  %v1003 = vunpack.c.h.b16 %v850
  %v1004 = vunpack.c.l.b16 %v851
  %v1005 = vunpack.c.h.b16 %v851
  %v1006 = vunpack.c.l.b16 %v852
  %v1007 = vunpack.c.h.b16 %v852
  %v1008 = vunpack.c.l.b16 %v853
  %v1009 = vunpack.c.h.b16 %v853
  %v1010 = vunpack.c.l.b16 %v854
  %v1011 = vunpack.c.h.b16 %v854
  %v1012 = vunpack.c.l.b16 %v855
  %v1013 = vunpack.c.h.b16 %v855
  %v1014 = vunpack.c.l.b16 %v856
  %v1015 = vunpack.c.h.b16 %v856
  %v1016 = vunpack.c.l.b16 %v857
  %v1017 = vunpack.c.h.b16 %v857
  %v1018 = vunpack.c.l.b16 %v858
  %v1019 = vunpack.c.h.b16 %v858
  %v1020 = vunpack.c.l.b16 %v859
  %v1021 = vunpack.c.h.b16 %v859
  %v1022 = vunpack.c.l.b16 %v860
  %v1023 = vunpack.c.h.b16 %v860
  %v1024 = vunpack.c.l.b16 %v861
  %v1025 = vunpack.c.h.b16 %v861
  %v1026 = vunpack.c.l.b16 %v862
  %v1027 = vunpack.c.h.b16 %v862
  %v1028 = vunpack.c.l.b16 %v863
  %v1029 = vunpack.c.h.b16 %v863
  %v1030 = vunpack.c.l.b16 %v864
  %v1031 = vunpack.c.h.b16 %v864
  %v1032 = vunpack.c.l.b16 %v865
  %v1033 = vunpack.c.h.b16 %v865
  %v1034 = vunpack.c.l.b16 %v866
  %v1035 = vunpack.c.h.b16 %v866
  %v1036 = vunpack.c.l.b16 %v867
  %v1037 = vunpack.c.h.b16 %v867
  %v1038 = vunpack.c.l.b16 %v868
  %v1039 = vunpack.c.h.b16 %v868
  %v1040 = vpack.c.b16 %v928, %v926
  %v1041 = vpack.c.b16 %v929, %v927
  %v1042 = vpack.c.b16 %v932, %v930
  %v1043 = vpack.c.b16 %v933, %v931
  %v1044 = vpack.c.b16 %v936, %v934
  %v1045 = vpack.c.b16 %v937, %v935
  %v1046 = vpack.c.b16 %v940, %v938
  %v1047 = vpack.c.b16 %v941, %v939
  %v1048 = vpack.c.b16 %v944, %v942
  %v1049 = vpack.c.b16 %v945, %v943
  %v1050 = vpack.c.b16 %v948, %v946
  %v1051 = vpack.c.b16 %v949, %v947
  %v1052 = vpack.c.b16 %v952, %v950
  %v1053 = vpack.c.b16 %v953, %v951
  %v1054 = vpack.c.b16 %v956, %v954
  %v1055 = vpack.c.b16 %v957, %v955
  %v1056 = vpack.c.b16 %v960, %v958
  %v1057 = vpack.c.b16 %v961, %v959
  %v1058 = vpack.c.b16 %v964, %v962
  %v1059 = vpack.c.b16 %v965, %v963
  %v1060 = vpack.c.b16 %v968, %v966
  %v1061 = vpack.c.b16 %v969, %v967
  %v1062 = vpack.c.b16 %v972, %v970
  %v1063 = vpack.c.b16 %v973, %v971
  %v1064 = vpack.c.b16 %v976, %v974
  %v1065 = vpack.c.b16 %v977, %v975
  %v1066 = vpack.c.b16 %v980, %v978
  %v1067 = vpack.c.b16 %v981, %v979
  %v1068 = vpack.c.b16 %v984, %v982
  %v1069 = vpack.c.b16 %v985, %v983
  %v1070 = vpack.c.b16 %v988, %v986
  %v1071 = vpack.c.b16 %v989, %v987
  %v1072 = vpack.c.b16 %v992, %v990
  %v1073 = vpack.c.b16 %v993, %v991
  %v1074 = vpack.c.b16 %v996, %v994
  %v1075 = vpack.c.b16 %v997, %v995
  %v1076 = vpack.c.b16 %v1000, %v998
  %v1077 = vpack.c.b16 %v1001, %v999
  %v1078 = vpack.c.b16 %v1004, %v1002
  %v1079 = vpack.c.b16 %v1005, %v1003
  %v1080 = vpack.c.b16 %v1008, %v1006
  %v1081 = vpack.c.b16 %v1009, %v1007
  %v1082 = vpack.c.b16 %v1012, %v1010
  %v1083 = vpack.c.b16 %v1013, %v1011
  %v1084 = vpack.c.b16 %v1016, %v1014
  %v1085 = vpack.c.b16 %v1017, %v1015
  %v1086 = vpack.c.b16 %v1020, %v1018
  %v1087 = vpack.c.b16 %v1021, %v1019
  %v1088 = vpack.c.b16 %v1024, %v1022
  %v1089 = vpack.c.b16 %v1025, %v1023
  %v1090 = vpack.c.b16 %v1028, %v1026
  %v1091 = vpack.c.b16 %v1029, %v1027
  %v1092 = vpack.c.b16 %v1032, %v1030
  %v1093 = vpack.c.b16 %v1033, %v1031
  %v1094 = vpack.c.b16 %v1036, %v1034
  %v1095 = vpack.c.b16 %v1037, %v1035
  %v1096 = vpack.c.b16 %v1038, %v1038
  %v1097 = vpack.c.b16 %v1039, %v1039
  %v1155 = vsel %vm723, %v1096, 0
  %v1158 = vsel %vm723, %v1097, 0
  %1160 = vmatprep.subr.bf16.mxu0 %v1041
  %1161 = vmatpush1.bf16.msra.mxu0 %v1040
  %1162 = vmatprep.subr.bf16.mxu0 %v1043
  %1163 = vmatpush1.bf16.msra.mxu0 %v1042
  %1164 = vmatprep.subr.bf16.mxu0 %v1045
  %1165 = vmatpush1.bf16.msra.mxu0 %v1044
  %1166 = vmatprep.subr.bf16.mxu0 %v1047
  %1167 = vmatpush1.bf16.msra.mxu0 %v1046
  %1168 = vmatprep.subr.bf16.mxu0 %v1049
  %1169 = vmatpush1.bf16.msra.mxu0 %v1048
  %1170 = vmatprep.subr.bf16.mxu0 %v1051
  %1171 = vmatpush1.bf16.msra.mxu0 %v1050
  %1172 = vmatprep.subr.bf16.mxu0 %v1053
  %1173 = vmatpush1.bf16.msra.mxu0 %v1052
  %1174 = vmatprep.subr.bf16.mxu0 %v1055
  %1175 = vmatpush1.bf16.msra.mxu0 %v1054
  %1176 = vmatprep.subr.bf16.mxu0 %v1057
  %1177 = vmatpush1.bf16.msra.mxu0 %v1056
  %1178 = vmatprep.subr.bf16.mxu0 %v1059
  %1179 = vmatpush1.bf16.msra.mxu0 %v1058
  %1180 = vmatprep.subr.bf16.mxu0 %v1061
  %1181 = vmatpush1.bf16.msra.mxu0 %v1060
  %1182 = vmatprep.subr.bf16.mxu0 %v1063
  %1183 = vmatpush1.bf16.msra.mxu0 %v1062
  %1184 = vmatprep.subr.bf16.mxu0 %v1065
  %1185 = vmatpush1.bf16.msra.mxu0 %v1064
  %1186 = vmatprep.subr.bf16.mxu0 %v1067
  %1187 = vmatpush1.bf16.msra.mxu0 %v1066
  %1188 = vmatprep.subr.bf16.mxu0 %v1069
  %1189 = vmatpush1.bf16.msra.mxu0 %v1068
  %1190 = vmatprep.subr.bf16.mxu0 %v1071
  %1191 = vmatpush1.bf16.msra.mxu0 %v1070
  %1192 = vmatprep.mubr.bf16.mxu0 %v374
  %1193 = vmatmul.mubr.bf16.gmra.mrb[0].mxu0 %v373
  %v1194 = vpop.f32.mrb[0].mxu0
  %v1195 = vadd.f32 0.0, %v1194
  %v1196 = vpop.f32.mrb[0].mxu0
  %v1197 = vadd.f32 0.0, %v1196
  %v1198 = vpop.f32.mrb[0].mxu0
  %v1199 = vpop.f32.mrb[0].mxu0
  %1200 = vdwg.mxu0
  %1201 = vmatprep.subr.bf16.mxu0 %v1073
  %1202 = vmatpush1.bf16.msra.mxu0 %v1072
  %1203 = vmatprep.subr.bf16.mxu0 %v1075
  %1204 = vmatpush1.bf16.msra.mxu0 %v1074
  %1205 = vmatprep.subr.bf16.mxu0 %v1077
  %1206 = vmatpush1.bf16.msra.mxu0 %v1076
  %1207 = vmatprep.subr.bf16.mxu0 %v1079
  %1208 = vmatpush1.bf16.msra.mxu0 %v1078
  %1209 = vmatprep.subr.bf16.mxu0 %v1081
  %1210 = vmatpush1.bf16.msra.mxu0 %v1080
  %1211 = vmatprep.subr.bf16.mxu0 %v1083
  %1212 = vmatpush1.bf16.msra.mxu0 %v1082
  %1213 = vmatprep.subr.bf16.mxu0 %v1085
  %1214 = vmatpush1.bf16.msra.mxu0 %v1084
  %1215 = vmatprep.subr.bf16.mxu0 %v1087
  %1216 = vmatpush1.bf16.msra.mxu0 %v1086
  %1217 = vmatprep.subr.bf16.mxu0 %v1089
  %1218 = vmatpush1.bf16.msra.mxu0 %v1088
  %1219 = vmatprep.subr.bf16.mxu0 %v1091
  %1220 = vmatpush1.bf16.msra.mxu0 %v1090
  %1221 = vmatprep.subr.bf16.mxu0 %v1093
  %1222 = vmatpush1.bf16.msra.mxu0 %v1092
  %1223 = vmatprep.subr.bf16.mxu0 %v1095
  %1224 = vmatpush1.bf16.msra.mxu0 %v1094
  %1225 = vmatprep.subr.bf16.mxu0 %v1158
  %1226 = vmatpush1.bf16.msra.mxu0 %v1155
  %1227 = vmatprep.subr.bf16.mxu0 0
  %1228 = vmatpush1.bf16.msra.mxu0 0
  %1229 = vmatprep.subr.bf16.mxu0 0
  %1230 = vmatpush1.bf16.msra.mxu0 0
  %1231 = vmatprep.subr.bf16.mxu0 0
  %1232 = vmatpush1.bf16.msra.mxu0 0
  %1233 = vmatprep.mubr.bf16.mxu0 %v721
  %1234 = vmatmul.mubr.bf16.gmra.mrb[0].mxu0 %v375
  %v1235 = vpop.f32.mrb[0].mxu0
  %v1236 = vadd.f32 %v1195, %v1235
  %v1237 = vpop.f32.mrb[0].mxu0
  %v1238 = vadd.f32 %v1197, %v1237
  %v1239 = vpop.f32.mrb[0].mxu0
  %v1240 = vpop.f32.mrb[0].mxu0
  %1241 = vdwg.mxu0
  %v1242 = vmax.f32 %v806, %v1236
  %v1243 = vmax.f32 %v808, %v1238
  %v1244 = vpack.c.bf16 %v1242, %v1242
  %v1245 = vpack.c.bf16 %v1243, %v1243
  %v1246 = vld [vmem:[%s6] sm:$0xff]
  %v1247 = vld [vmem:[%s6 + $0x8] sm:$0xf]
  %v1248 = vld [vmem:[%s6 + $0xc] sm:$0xff]
  %v1249 = vld [vmem:[%s6 + $0x14] sm:$0xf]
  %v1250 = vld [vmem:[%s6 + $0x18] sm:$0xff]
  %v1251 = vld [vmem:[%s6 + $0x20] sm:$0xf]
  %v1252 = vld [vmem:[%s6 + $0x24] sm:$0xff]
  %v1253 = vld [vmem:[%s6 + $0x2c] sm:$0xf]
  %v1254 = vld [vmem:[%s6 + $0x30] sm:$0xff]
  %v1255 = vld [vmem:[%s6 + $0x38] sm:$0xf]
  %v1256 = vld [vmem:[%s6 + $0x3c] sm:$0xff]
  %v1257 = vld [vmem:[%s6 + $0x44] sm:$0xf]
  %v1258 = vld [vmem:[%s6 + $0x48] sm:$0xff]
  %v1259 = vld [vmem:[%s6 + $0x50] sm:$0xf]
  %v1260 = vld [vmem:[%s6 + $0x54] sm:$0xff]
  %v1261 = vld [vmem:[%s6 + $0x5c] sm:$0xf]
  %v1262 = vld [vmem:[%s6 + $0x60] sm:$0xff]
  %v1263 = vld [vmem:[%s6 + $0x68] sm:$0xf]
  %v1264 = vld [vmem:[%s6 + $0x6c] sm:$0xff]
  %v1265 = vld [vmem:[%s6 + $0x74] sm:$0xf]
  %v1266 = vld [vmem:[%s6 + $0x78] sm:$0xff]
  %v1267 = vld [vmem:[%s6 + $0x80] sm:$0xf]
  %v1268 = vld [vmem:[%s6 + $0x84] sm:$0xff]
  %v1269 = vld [vmem:[%s6 + $0x8c] sm:$0xf]
  %v1270 = vld [vmem:[%s6 + $0x90] sm:$0xff]
  %v1271 = vld [vmem:[%s6 + $0x98] sm:$0xf]
  %v1272 = vld [vmem:[%s6 + $0x9c] sm:$0xff]
  %v1273 = vld [vmem:[%s6 + $0xa4] sm:$0xf]
  %v1274 = vld [vmem:[%s6 + $0xa8] sm:$0xff]
  %v1275 = vld [vmem:[%s6 + $0xb0] sm:$0xf]
  %v1276 = vld [vmem:[%s6 + $0xb4] sm:$0xff]
  %v1277 = vld [vmem:[%s6 + $0xbc] sm:$0xf]
  %v1278 = vld [vmem:[%s6 + $0xc0] sm:$0xff]
  %v1279 = vld [vmem:[%s6 + $0xc8] sm:$0xf]
  %v1280 = vld [vmem:[%s6 + $0xcc] sm:$0xff]
  %v1281 = vld [vmem:[%s6 + $0xd4] sm:$0xf]
  %v1282 = vld [vmem:[%s6 + $0xd8] sm:$0xff]
  %v1283 = vld [vmem:[%s6 + $0xe0] sm:$0xf]
  %v1284 = vld [vmem:[%s6 + $0xe4] sm:$0xff]
  %v1285 = vld [vmem:[%s6 + $0xec] sm:$0xf]
  %v1286 = vld [vmem:[%s6 + $0xf0] sm:$0xff]
  %v1287 = vld [vmem:[%s6 + $0xf8] sm:$0xf]
  %v1288 = vld [vmem:[%s6 + $0xfc] sm:$0xff]
  %v1289 = vld [vmem:[%s6 + $0x104] sm:$0xf]
  %v1290 = vld [vmem:[%s6 + $0x108] sm:$0xff]
  %v1291 = vld [vmem:[%s6 + $0x110] sm:$0xf]
  %v1292 = vld [vmem:[%s6 + $0x114] sm:$0xff]
  %v1293 = vld [vmem:[%s6 + $0x11c] sm:$0xf]
  %v1294 = vld [vmem:[%s6 + $0x120] sm:$0xff]
  %v1295 = vld [vmem:[%s6 + $0x128] sm:$0xf]
  %v1296 = vld [vmem:[%s6 + $0x12c] sm:$0xff]
  %v1297 = vld [vmem:[%s6 + $0x134] sm:$0xf]
  %v1298 = vld [vmem:[%s6 + $0x138] sm:$0xff]
  %v1299 = vld [vmem:[%s6 + $0x140] sm:$0xf]
  %v1300 = vld [vmem:[%s6 + $0x144] sm:$0xff]
  %v1301 = vld [vmem:[%s6 + $0x14c] sm:$0xf]
  %v1302 = vld [vmem:[%s7] sm:$0x7]
  %v1304 = vlaneseq
  %v1305 = vshrl.u32 %v1304, 7
  %v1306 = vsub.s32 0, %v1305
  %v1307 = vrot.slane %v1302, %v1306
  %v1308 = vlaneseq
  %v1309 = vshrl.u32 %v1308, 7
  %v1310 = vsub.s32 1, %v1309
  %v1311 = vrot.slane %v1302, %v1310
  %v1312 = vlaneseq
  %v1313 = vshrl.u32 %v1312, 7
  %v1314 = vsub.s32 2, %v1313
  %v1315 = vrot.slane %v1302, %v1314
  %v1375 = vunpack.c.l.b16 %v1246
  %v1376 = vunpack.c.h.b16 %v1246
  %v1377 = vunpack.c.l.b16 %v1247
  %v1378 = vunpack.c.l.b16 %v1248
  %v1379 = vunpack.c.h.b16 %v1248
  %v1380 = vunpack.c.l.b16 %v1249
  %v1381 = vunpack.c.l.b16 %v1250
  %v1382 = vunpack.c.h.b16 %v1250
  %v1383 = vunpack.c.l.b16 %v1251
  %v1384 = vunpack.c.l.b16 %v1252
  %v1385 = vunpack.c.h.b16 %v1252
  %v1386 = vunpack.c.l.b16 %v1253
  %v1387 = vunpack.c.l.b16 %v1254
  %v1388 = vunpack.c.h.b16 %v1254
  %v1389 = vunpack.c.l.b16 %v1255
  %v1390 = vunpack.c.l.b16 %v1256
  %v1391 = vunpack.c.h.b16 %v1256
  %v1392 = vunpack.c.l.b16 %v1257
  %v1393 = vunpack.c.l.b16 %v1258
  %v1394 = vunpack.c.h.b16 %v1258
  %v1395 = vunpack.c.l.b16 %v1259
  %v1396 = vunpack.c.l.b16 %v1260
  %v1397 = vunpack.c.h.b16 %v1260
  %v1398 = vunpack.c.l.b16 %v1261
  %v1399 = vunpack.c.l.b16 %v1262
  %v1400 = vunpack.c.h.b16 %v1262
  %v1401 = vunpack.c.l.b16 %v1263
  %v1402 = vunpack.c.l.b16 %v1264
  %v1403 = vunpack.c.h.b16 %v1264
  %v1404 = vunpack.c.l.b16 %v1265
  %v1405 = vunpack.c.l.b16 %v1266
  %v1406 = vunpack.c.h.b16 %v1266
  %v1407 = vunpack.c.l.b16 %v1267
  %v1408 = vunpack.c.l.b16 %v1268
  %v1409 = vunpack.c.h.b16 %v1268
  %v1410 = vunpack.c.l.b16 %v1269
  %v1411 = vunpack.c.l.b16 %v1270
  %v1412 = vunpack.c.h.b16 %v1270
  %v1413 = vunpack.c.l.b16 %v1271
  %v1414 = vunpack.c.l.b16 %v1272
  %v1415 = vunpack.c.h.b16 %v1272
  %v1416 = vunpack.c.l.b16 %v1273
  %v1417 = vunpack.c.l.b16 %v1274
  %v1418 = vunpack.c.h.b16 %v1274
  %v1419 = vunpack.c.l.b16 %v1275
  %v1420 = vunpack.c.l.b16 %v1276
  %v1421 = vunpack.c.h.b16 %v1276
  %v1422 = vunpack.c.l.b16 %v1277
  %v1423 = vunpack.c.l.b16 %v1278
  %v1424 = vunpack.c.h.b16 %v1278
  %v1425 = vunpack.c.l.b16 %v1279
  %v1426 = vunpack.c.l.b16 %v1280
  %v1427 = vunpack.c.h.b16 %v1280
  %v1428 = vunpack.c.l.b16 %v1281
  %v1429 = vunpack.c.l.b16 %v1282
  %v1430 = vunpack.c.h.b16 %v1282
  %v1431 = vunpack.c.l.b16 %v1283
  %v1432 = vunpack.c.l.b16 %v1284
  %v1433 = vunpack.c.h.b16 %v1284
  %v1434 = vunpack.c.l.b16 %v1285
  %v1435 = vunpack.c.l.b16 %v1286
  %v1436 = vunpack.c.h.b16 %v1286
  %v1437 = vunpack.c.l.b16 %v1287
  %v1438 = vunpack.c.l.b16 %v1288
  %v1439 = vunpack.c.h.b16 %v1288
  %v1440 = vunpack.c.l.b16 %v1289
  %v1441 = vunpack.c.l.b16 %v1290
  %v1442 = vunpack.c.h.b16 %v1290
  %v1443 = vunpack.c.l.b16 %v1291
  %v1444 = vunpack.c.l.b16 %v1292
  %v1445 = vunpack.c.h.b16 %v1292
  %v1446 = vunpack.c.l.b16 %v1293
  %v1447 = vunpack.c.l.b16 %v1294
  %v1448 = vunpack.c.h.b16 %v1294
  %v1449 = vunpack.c.l.b16 %v1295
  %v1450 = vunpack.c.l.b16 %v1296
  %v1451 = vunpack.c.h.b16 %v1296
  %v1452 = vunpack.c.l.b16 %v1297
  %v1453 = vunpack.c.l.b16 %v1298
  %v1454 = vunpack.c.h.b16 %v1298
  %v1455 = vunpack.c.l.b16 %v1299
  %v1456 = vunpack.c.l.b16 %v1300
  %v1457 = vunpack.c.h.b16 %v1300
  %v1458 = vunpack.c.l.b16 %v1301
  %v1459 = vpack.c.b16 %v1378, %v1375
  %v1460 = vpack.c.b16 %v1379, %v1376
  %v1461 = vpack.c.b16 %v1380, %v1377
  %v1462 = vpack.c.b16 %v1384, %v1381
  %v1463 = vpack.c.b16 %v1385, %v1382
  %v1464 = vpack.c.b16 %v1386, %v1383
  %v1465 = vpack.c.b16 %v1390, %v1387
  %v1466 = vpack.c.b16 %v1391, %v1388
  %v1467 = vpack.c.b16 %v1392, %v1389
  %v1468 = vpack.c.b16 %v1396, %v1393
  %v1469 = vpack.c.b16 %v1397, %v1394
  %v1470 = vpack.c.b16 %v1398, %v1395
  %v1471 = vpack.c.b16 %v1402, %v1399
  %v1472 = vpack.c.b16 %v1403, %v1400
  %v1473 = vpack.c.b16 %v1404, %v1401
  %v1474 = vpack.c.b16 %v1408, %v1405
  %v1475 = vpack.c.b16 %v1409, %v1406
  %v1476 = vpack.c.b16 %v1410, %v1407
  %v1477 = vpack.c.b16 %v1414, %v1411
  %v1478 = vpack.c.b16 %v1415, %v1412
  %v1479 = vpack.c.b16 %v1416, %v1413
  %v1480 = vpack.c.b16 %v1420, %v1417
  %v1481 = vpack.c.b16 %v1421, %v1418
  %v1482 = vpack.c.b16 %v1422, %v1419
  %v1483 = vpack.c.b16 %v1426, %v1423
  %v1484 = vpack.c.b16 %v1427, %v1424
  %v1485 = vpack.c.b16 %v1428, %v1425
  %v1486 = vpack.c.b16 %v1432, %v1429
  %v1487 = vpack.c.b16 %v1433, %v1430
  %v1488 = vpack.c.b16 %v1434, %v1431
  %v1489 = vpack.c.b16 %v1438, %v1435
  %v1490 = vpack.c.b16 %v1439, %v1436
  %v1491 = vpack.c.b16 %v1440, %v1437
  %v1492 = vpack.c.b16 %v1444, %v1441
  %v1493 = vpack.c.b16 %v1445, %v1442
  %v1494 = vpack.c.b16 %v1446, %v1443
  %v1495 = vpack.c.b16 %v1450, %v1447
  %v1496 = vpack.c.b16 %v1451, %v1448
  %v1497 = vpack.c.b16 %v1452, %v1449
  %v1498 = vpack.c.b16 %v1456, %v1453
  %v1499 = vpack.c.b16 %v1457, %v1454
  %v1500 = vpack.c.b16 %v1458, %v1455
  %vm1543 = vcmask 785408
  %v1545 = vsel %vm1543, %v1245, 0
  %1547 = vmatprep.subr.bf16.mxu0 %v1460
  %1548 = vmatpush1.bf16.msra.mxu0 %v1459
  %1549 = vmatprep.subr.bf16.mxu0 %v1463
  %1550 = vmatpush1.bf16.msra.mxu0 %v1462
  %1551 = vmatprep.subr.bf16.mxu0 %v1466
  %1552 = vmatpush1.bf16.msra.mxu0 %v1465
  %1553 = vmatprep.subr.bf16.mxu0 %v1469
  %1554 = vmatpush1.bf16.msra.mxu0 %v1468
  %1555 = vmatprep.subr.bf16.mxu0 %v1472
  %1556 = vmatpush1.bf16.msra.mxu0 %v1471
  %1557 = vmatprep.subr.bf16.mxu0 %v1475
  %1558 = vmatpush1.bf16.msra.mxu0 %v1474
  %1559 = vmatprep.subr.bf16.mxu0 %v1478
  %1560 = vmatpush1.bf16.msra.mxu0 %v1477
  %1561 = vmatprep.subr.bf16.mxu0 %v1481
  %1562 = vmatpush1.bf16.msra.mxu0 %v1480
  %1563 = vmatprep.subr.bf16.mxu0 %v1484
  %1564 = vmatpush1.bf16.msra.mxu0 %v1483
  %1565 = vmatprep.subr.bf16.mxu0 %v1487
  %1566 = vmatpush1.bf16.msra.mxu0 %v1486
  %1567 = vmatprep.subr.bf16.mxu0 %v1490
  %1568 = vmatpush1.bf16.msra.mxu0 %v1489
  %1569 = vmatprep.subr.bf16.mxu0 %v1493
  %1570 = vmatpush1.bf16.msra.mxu0 %v1492
  %1571 = vmatprep.subr.bf16.mxu0 %v1496
  %1572 = vmatpush1.bf16.msra.mxu0 %v1495
  %1573 = vmatprep.subr.bf16.mxu0 %v1499
  %1574 = vmatpush1.bf16.msra.mxu0 %v1498
  %1575 = vmatprep.subr.bf16.mxu0 0
  %1576 = vmatpush1.bf16.msra.mxu0 0
  %1577 = vmatprep.subr.bf16.mxu0 0
  %1578 = vmatpush1.bf16.msra.mxu0 0
  %1579 = vmatprep.mubr.bf16.mxu0 %v1545
  %1580 = vmatmul.mubr.bf16.gmra.mrb[0].mxu0 %v1244
  %v1581 = vpop.f32.mrb[0].mxu0
  %v1582 = vadd.f32 %v1307, %v1581
  %v1583 = vpop.f32.mrb[0].mxu0
  %v1584 = vadd.f32 %v1311, %v1583
  %v1585 = vpop.f32.mrb[0].mxu0
  %v1586 = vpop.f32.mrb[0].mxu0
  %1587 = vdwg.mxu0
  %1588 = vmatprep.subr.bf16.mxu0 0
  %1589 = vmatpush1.bf16.msra.mxu0 %v1461
  %1590 = vmatprep.subr.bf16.mxu0 0
  %1591 = vmatpush1.bf16.msra.mxu0 %v1464
  %1592 = vmatprep.subr.bf16.mxu0 0
  %1593 = vmatpush1.bf16.msra.mxu0 %v1467
  %1594 = vmatprep.subr.bf16.mxu0 0
  %1595 = vmatpush1.bf16.msra.mxu0 %v1470
  %1596 = vmatprep.subr.bf16.mxu0 0
  %1597 = vmatpush1.bf16.msra.mxu0 %v1473
  %1598 = vmatprep.subr.bf16.mxu0 0
  %1599 = vmatpush1.bf16.msra.mxu0 %v1476
  %1600 = vmatprep.subr.bf16.mxu0 0
  %1601 = vmatpush1.bf16.msra.mxu0 %v1479
  %1602 = vmatprep.subr.bf16.mxu0 0
  %1603 = vmatpush1.bf16.msra.mxu0 %v1482
  %1604 = vmatprep.subr.bf16.mxu0 0
  %1605 = vmatpush1.bf16.msra.mxu0 %v1485
  %1606 = vmatprep.subr.bf16.mxu0 0
  %1607 = vmatpush1.bf16.msra.mxu0 %v1488
  %1608 = vmatprep.subr.bf16.mxu0 0
  %1609 = vmatpush1.bf16.msra.mxu0 %v1491
  %1610 = vmatprep.subr.bf16.mxu0 0
  %1611 = vmatpush1.bf16.msra.mxu0 %v1494
  %1612 = vmatprep.subr.bf16.mxu0 0
  %1613 = vmatpush1.bf16.msra.mxu0 %v1497
  %1614 = vmatprep.subr.bf16.mxu0 0
  %1615 = vmatpush1.bf16.msra.mxu0 %v1500
  %1616 = vmatprep.subr.bf16.mxu0 0
  %1617 = vmatpush1.bf16.msra.mxu0 0
  %1618 = vmatprep.subr.bf16.mxu0 0
  %1619 = vmatpush1.bf16.msra.mxu0 0
  %1620 = vmatprep.mubr.bf16.mxu0 %v1545
  %1621 = vmatmul.mubr.bf16.gmra.mrb[0].mxu0 %v1244
  %v1622 = vpop.f32.mrb[0].mxu0
  %v1623 = vadd.f32 %v1315, %v1622
  %v1624 = vpop.f32.mrb[0].mxu0
  %v1625 = vpop.f32.mrb[0].mxu0
  %v1626 = vpop.f32.mrb[0].mxu0
  %1627 = vdwg.mxu0
  %v1628 = vmax.f32 %v1582, 0.0
  %v1629 = vmax.f32 %v1584, 0.0
  %v1630 = vmax.f32 %v1623, 0.0
  %v1631 = vpack.c.bf16 %v1628, %v1628
  %v1632 = vpack.c.bf16 %v1629, %v1629
  %v1633 = vpack.c.bf16 %v1630, %v1630
  %v1634 = vld [vmem:[%s8] sm:$0xff]
  %v1635 = vld [vmem:[%s8 + $0x8] sm:$0xff]
  %v1636 = vld [vmem:[%s8 + $0x10] sm:$0xff]
  %v1637 = vld [vmem:[%s8 + $0x18] sm:$0xff]
  %v1638 = vld [vmem:[%s8 + $0x20] sm:$0xff]
  %v1639 = vld [vmem:[%s8 + $0x28] sm:$0xff]
  %v1640 = vld [vmem:[%s8 + $0x30] sm:$0xff]
  %v1641 = vld [vmem:[%s8 + $0x38] sm:$0xff]
  %v1642 = vld [vmem:[%s8 + $0x40] sm:$0xff]
  %v1643 = vld [vmem:[%s8 + $0x48] sm:$0xff]
  %v1644 = vld [vmem:[%s8 + $0x50] sm:$0xff]
  %v1645 = vld [vmem:[%s8 + $0x58] sm:$0xff]
  %v1646 = vld [vmem:[%s8 + $0x60] sm:$0xff]
  %v1647 = vld [vmem:[%s8 + $0x68] sm:$0xff]
  %v1648 = vld [vmem:[%s8 + $0x70] sm:$0xff]
  %v1649 = vld [vmem:[%s8 + $0x78] sm:$0xff]
  %v1650 = vld [vmem:[%s8 + $0x80] sm:$0xff]
  %v1651 = vld [vmem:[%s8 + $0x88] sm:$0xff]
  %v1652 = vld [vmem:[%s8 + $0x90] sm:$0xff]
  %v1653 = vld [vmem:[%s8 + $0x98] sm:$0xff]
  %v1654 = vld [vmem:[%s8 + $0xa0] sm:$0xff]
  %v1655 = vld [vmem:[%s8 + $0xa8] sm:$0xff]
  %v1656 = vld [vmem:[%s8 + $0xb0] sm:$0xff]
  %v1657 = vld [vmem:[%s8 + $0xb8] sm:$0xff]
  %v1658 = vld [vmem:[%s8 + $0xc0] sm:$0xff]
  %v1659 = vld [vmem:[%s8 + $0xc8] sm:$0xff]
  %v1660 = vld [vmem:[%s8 + $0xd0] sm:$0xff]
  %v1661 = vld [vmem:[%s8 + $0xd8] sm:$0xff]
  %v1662 = vld [vmem:[%s8 + $0xe0] sm:$0xff]
  %v1663 = vld [vmem:[%s8 + $0xe8] sm:$0xff]
  %v1664 = vld [vmem:[%s8 + $0xf0] sm:$0xff]
  %v1665 = vld [vmem:[%s8 + $0xf8] sm:$0xff]
  %v1666 = vld [vmem:[%s8 + $0x100] sm:$0xff]
  %v1667 = vld [vmem:[%s8 + $0x108] sm:$0xff]
  %v1668 = vld [vmem:[%s8 + $0x110] sm:$0xff]
  %v1669 = vld [vmem:[%s8 + $0x118] sm:$0xff]
  %v1670 = vld [vmem:[%s8 + $0x120] sm:$0xff]
  %v1671 = vld [vmem:[%s8 + $0x128] sm:$0xff]
  %v1672 = vld [vmem:[%s8 + $0x130] sm:$0xff]
  %v1673 = vld [vmem:[%s8 + $0x138] sm:$0xff]
  %v1674 = vld [vmem:[%s8 + $0x140] sm:$0xff]
  %v1716 = vunpack.c.l.b16 %v1634
  %v1717 = vunpack.c.h.b16 %v1634
  %v1718 = vunpack.c.l.b16 %v1635
  %v1719 = vunpack.c.h.b16 %v1635
  %v1720 = vunpack.c.l.b16 %v1636
  %v1721 = vunpack.c.h.b16 %v1636
  %v1722 = vunpack.c.l.b16 %v1637
  %v1723 = vunpack.c.h.b16 %v1637
  %v1724 = vunpack.c.l.b16 %v1638
  %v1725 = vunpack.c.h.b16 %v1638
  %v1726 = vunpack.c.l.b16 %v1639
  %v1727 = vunpack.c.h.b16 %v1639
  %v1728 = vunpack.c.l.b16 %v1640
  %v1729 = vunpack.c.h.b16 %v1640
  %v1730 = vunpack.c.l.b16 %v1641
  %v1731 = vunpack.c.h.b16 %v1641
  %v1732 = vunpack.c.l.b16 %v1642
  %v1733 = vunpack.c.h.b16 %v1642
  %v1734 = vunpack.c.l.b16 %v1643
  %v1735 = vunpack.c.h.b16 %v1643
  %v1736 = vunpack.c.l.b16 %v1644
  %v1737 = vunpack.c.h.b16 %v1644
  %v1738 = vunpack.c.l.b16 %v1645
  %v1739 = vunpack.c.h.b16 %v1645
  %v1740 = vunpack.c.l.b16 %v1646
  %v1741 = vunpack.c.h.b16 %v1646
  %v1742 = vunpack.c.l.b16 %v1647
  %v1743 = vunpack.c.h.b16 %v1647
  %v1744 = vunpack.c.l.b16 %v1648
  %v1745 = vunpack.c.h.b16 %v1648
  %v1746 = vunpack.c.l.b16 %v1649
  %v1747 = vunpack.c.h.b16 %v1649
  %v1748 = vunpack.c.l.b16 %v1650
  %v1749 = vunpack.c.h.b16 %v1650
  %v1750 = vunpack.c.l.b16 %v1651
  %v1751 = vunpack.c.h.b16 %v1651
  %v1752 = vunpack.c.l.b16 %v1652
  %v1753 = vunpack.c.h.b16 %v1652
  %v1754 = vunpack.c.l.b16 %v1653
  %v1755 = vunpack.c.h.b16 %v1653
  %v1756 = vunpack.c.l.b16 %v1654
  %v1757 = vunpack.c.h.b16 %v1654
  %v1758 = vunpack.c.l.b16 %v1655
  %v1759 = vunpack.c.h.b16 %v1655
  %v1760 = vunpack.c.l.b16 %v1656
  %v1761 = vunpack.c.h.b16 %v1656
  %v1762 = vunpack.c.l.b16 %v1657
  %v1763 = vunpack.c.h.b16 %v1657
  %v1764 = vunpack.c.l.b16 %v1658
  %v1765 = vunpack.c.h.b16 %v1658
  %v1766 = vunpack.c.l.b16 %v1659
  %v1767 = vunpack.c.h.b16 %v1659
  %v1768 = vunpack.c.l.b16 %v1660
  %v1769 = vunpack.c.h.b16 %v1660
  %v1770 = vunpack.c.l.b16 %v1661
  %v1771 = vunpack.c.h.b16 %v1661
  %v1772 = vunpack.c.l.b16 %v1662
  %v1773 = vunpack.c.h.b16 %v1662
  %v1774 = vunpack.c.l.b16 %v1663
  %v1775 = vunpack.c.h.b16 %v1663
  %v1776 = vunpack.c.l.b16 %v1664
  %v1777 = vunpack.c.h.b16 %v1664
  %v1778 = vunpack.c.l.b16 %v1665
  %v1779 = vunpack.c.h.b16 %v1665
  %v1780 = vunpack.c.l.b16 %v1666
  %v1781 = vunpack.c.h.b16 %v1666
  %v1782 = vunpack.c.l.b16 %v1667
  %v1783 = vunpack.c.h.b16 %v1667
  %v1784 = vunpack.c.l.b16 %v1668
  %v1785 = vunpack.c.h.b16 %v1668
  %v1786 = vunpack.c.l.b16 %v1669
  %v1787 = vunpack.c.h.b16 %v1669
  %v1788 = vunpack.c.l.b16 %v1670
  %v1789 = vunpack.c.h.b16 %v1670
  %v1790 = vunpack.c.l.b16 %v1671
  %v1791 = vunpack.c.h.b16 %v1671
  %v1792 = vunpack.c.l.b16 %v1672
  %v1793 = vunpack.c.h.b16 %v1672
  %v1794 = vunpack.c.l.b16 %v1673
  %v1795 = vunpack.c.h.b16 %v1673
  %v1796 = vunpack.c.l.b16 %v1674
  %v1797 = vunpack.c.h.b16 %v1674
  %v1798 = vpack.c.b16 %v1718, %v1716
  %v1799 = vpack.c.b16 %v1719, %v1717
  %v1800 = vpack.c.b16 %v1722, %v1720
  %v1801 = vpack.c.b16 %v1723, %v1721
  %v1802 = vpack.c.b16 %v1726, %v1724
  %v1803 = vpack.c.b16 %v1727, %v1725
  %v1804 = vpack.c.b16 %v1730, %v1728
  %v1805 = vpack.c.b16 %v1731, %v1729
  %v1806 = vpack.c.b16 %v1734, %v1732
  %v1807 = vpack.c.b16 %v1735, %v1733
  %v1808 = vpack.c.b16 %v1738, %v1736
  %v1809 = vpack.c.b16 %v1739, %v1737
  %v1810 = vpack.c.b16 %v1742, %v1740
  %v1811 = vpack.c.b16 %v1743, %v1741
  %v1812 = vpack.c.b16 %v1746, %v1744
  %v1813 = vpack.c.b16 %v1747, %v1745
  %v1814 = vpack.c.b16 %v1750, %v1748
  %v1815 = vpack.c.b16 %v1751, %v1749
  %v1816 = vpack.c.b16 %v1754, %v1752
  %v1817 = vpack.c.b16 %v1755, %v1753
  %v1818 = vpack.c.b16 %v1758, %v1756
  %v1819 = vpack.c.b16 %v1759, %v1757
  %v1820 = vpack.c.b16 %v1762, %v1760
  %v1821 = vpack.c.b16 %v1763, %v1761
  %v1822 = vpack.c.b16 %v1766, %v1764
  %v1823 = vpack.c.b16 %v1767, %v1765
  %v1824 = vpack.c.b16 %v1770, %v1768
  %v1825 = vpack.c.b16 %v1771, %v1769
  %v1826 = vpack.c.b16 %v1774, %v1772
  %v1827 = vpack.c.b16 %v1775, %v1773
  %v1828 = vpack.c.b16 %v1778, %v1776
  %v1829 = vpack.c.b16 %v1779, %v1777
  %v1830 = vpack.c.b16 %v1782, %v1780
  %v1831 = vpack.c.b16 %v1783, %v1781
  %v1832 = vpack.c.b16 %v1786, %v1784
  %v1833 = vpack.c.b16 %v1787, %v1785
  %v1834 = vpack.c.b16 %v1790, %v1788
  %v1835 = vpack.c.b16 %v1791, %v1789
  %v1836 = vpack.c.b16 %v1794, %v1792
  %v1837 = vpack.c.b16 %v1795, %v1793
  %v1838 = vpack.c.b16 %v1796, %v1796
  %v1839 = vpack.c.b16 %v1797, %v1797
  %vm1880 = vcmask 588800
  %v1882 = vsel %vm1880, %v1633, 0
  %vm1884 = vcmask 1043456
  %v1886 = vsel %vm1884, %v1838, 0
  %v1889 = vsel %vm1884, %v1839, 0
  %1891 = vmatprep.subr.bf16.mxu0 %v1799
  %1892 = vmatpush1.bf16.msra.mxu0 %v1798
  %1893 = vmatprep.subr.bf16.mxu0 %v1801
  %1894 = vmatpush1.bf16.msra.mxu0 %v1800
  %1895 = vmatprep.subr.bf16.mxu0 %v1803
  %1896 = vmatpush1.bf16.msra.mxu0 %v1802
  %1897 = vmatprep.subr.bf16.mxu0 %v1805
  %1898 = vmatpush1.bf16.msra.mxu0 %v1804
  %1899 = vmatprep.subr.bf16.mxu0 %v1807
  %1900 = vmatpush1.bf16.msra.mxu0 %v1806
  %1901 = vmatprep.subr.bf16.mxu0 %v1809
  %1902 = vmatpush1.bf16.msra.mxu0 %v1808
  %1903 = vmatprep.subr.bf16.mxu0 %v1811
  %1904 = vmatpush1.bf16.msra.mxu0 %v1810
  %1905 = vmatprep.subr.bf16.mxu0 %v1813
  %1906 = vmatpush1.bf16.msra.mxu0 %v1812
  %1907 = vmatprep.subr.bf16.mxu0 %v1815
  %1908 = vmatpush1.bf16.msra.mxu0 %v1814
  %1909 = vmatprep.subr.bf16.mxu0 %v1817
  %1910 = vmatpush1.bf16.msra.mxu0 %v1816
  %1911 = vmatprep.subr.bf16.mxu0 %v1819
  %1912 = vmatpush1.bf16.msra.mxu0 %v1818
  %1913 = vmatprep.subr.bf16.mxu0 %v1821
  %1914 = vmatpush1.bf16.msra.mxu0 %v1820
  %1915 = vmatprep.subr.bf16.mxu0 %v1823
  %1916 = vmatpush1.bf16.msra.mxu0 %v1822
  %1917 = vmatprep.subr.bf16.mxu0 %v1825
  %1918 = vmatpush1.bf16.msra.mxu0 %v1824
  %1919 = vmatprep.subr.bf16.mxu0 %v1827
  %1920 = vmatpush1.bf16.msra.mxu0 %v1826
  %1921 = vmatprep.subr.bf16.mxu0 %v1829
  %1922 = vmatpush1.bf16.msra.mxu0 %v1828
  %1923 = vmatprep.mubr.bf16.mxu0 %v1632
  %1924 = vmatmul.mubr.bf16.gmra.mrb[0].mxu0 %v1631
  %v1925 = vpop.f32.mrb[0].mxu0
  %v1926 = vadd.f32 0.0, %v1925
  %v1927 = vpop.f32.mrb[0].mxu0
  %v1928 = vadd.f32 0.0, %v1927
  %v1929 = vpop.f32.mrb[0].mxu0
  %v1930 = vpop.f32.mrb[0].mxu0
  %1931 = vdwg.mxu0
  %1932 = vmatprep.subr.bf16.mxu0 %v1831
  %1933 = vmatpush1.bf16.msra.mxu0 %v1830
  %1934 = vmatprep.subr.bf16.mxu0 %v1833
  %1935 = vmatpush1.bf16.msra.mxu0 %v1832
  %1936 = vmatprep.subr.bf16.mxu0 %v1835
  %1937 = vmatpush1.bf16.msra.mxu0 %v1834
  %1938 = vmatprep.subr.bf16.mxu0 %v1837
  %1939 = vmatpush1.bf16.msra.mxu0 %v1836
  %1940 = vmatprep.subr.bf16.mxu0 %v1889
  %1941 = vmatpush1.bf16.msra.mxu0 %v1886
  %1942 = vmatprep.subr.bf16.mxu0 0
  %1943 = vmatpush1.bf16.msra.mxu0 0
  %1944 = vmatprep.subr.bf16.mxu0 0
  %1945 = vmatpush1.bf16.msra.mxu0 0
  %1946 = vmatprep.subr.bf16.mxu0 0
  %1947 = vmatpush1.bf16.msra.mxu0 0
  %1948 = vmatprep.subr.bf16.mxu0 0
  %1949 = vmatpush1.bf16.msra.mxu0 0
  %1950 = vmatprep.subr.bf16.mxu0 0
  %1951 = vmatpush1.bf16.msra.mxu0 0
  %1952 = vmatprep.subr.bf16.mxu0 0
  %1953 = vmatpush1.bf16.msra.mxu0 0
  %1954 = vmatprep.subr.bf16.mxu0 0
  %1955 = vmatpush1.bf16.msra.mxu0 0
  %1956 = vmatprep.subr.bf16.mxu0 0
  %1957 = vmatpush1.bf16.msra.mxu0 0
  %1958 = vmatprep.subr.bf16.mxu0 0
  %1959 = vmatpush1.bf16.msra.mxu0 0
  %1960 = vmatprep.subr.bf16.mxu0 0
  %1961 = vmatpush1.bf16.msra.mxu0 0
  %1962 = vmatprep.subr.bf16.mxu0 0
  %1963 = vmatpush1.bf16.msra.mxu0 0
  %1964 = vmatprep.mubr.bf16.mxu0 0
  %1965 = vmatmul.mubr.bf16.gmra.mrb[0].mxu0 %v1882
  %v1966 = vpop.f32.mrb[0].mxu0
  %v1967 = vadd.f32 %v1926, %v1966
  %v1968 = vpop.f32.mrb[0].mxu0
  %v1969 = vadd.f32 %v1928, %v1968
  %v1970 = vpop.f32.mrb[0].mxu0
  %v1971 = vpop.f32.mrb[0].mxu0
  %1972 = vdwg.mxu0
  %v1973 = vld [vmem:[%s9] sm:$0xff]
  %v1974 = vld [vmem:[%s9 + $0x8] sm:$0xff]
  %v1975 = vld [vmem:[%s9 + $0x10] sm:$0xff]
  %v1976 = vld [vmem:[%s9 + $0x18] sm:$0xff]
  %v1977 = vld [vmem:[%s9 + $0x20] sm:$0xff]
  %v1978 = vld [vmem:[%s9 + $0x28] sm:$0xff]
  %v1979 = vld [vmem:[%s9 + $0x30] sm:$0xff]
  %v1980 = vld [vmem:[%s9 + $0x38] sm:$0xff]
  %v1981 = vld [vmem:[%s9 + $0x40] sm:$0xff]
  %v1982 = vld [vmem:[%s9 + $0x48] sm:$0xff]
  %v1983 = vld [vmem:[%s9 + $0x50] sm:$0xff]
  %v1984 = vld [vmem:[%s9 + $0x58] sm:$0xff]
  %v1985 = vld [vmem:[%s9 + $0x60] sm:$0xff]
  %v1986 = vld [vmem:[%s9 + $0x68] sm:$0xff]
  %v1987 = vld [vmem:[%s9 + $0x70] sm:$0xff]
  %v1988 = vld [vmem:[%s9 + $0x78] sm:$0xff]
  %v1989 = vld [vmem:[%s9 + $0x80] sm:$0xff]
  %v1990 = vld [vmem:[%s9 + $0x88] sm:$0xff]
  %v1991 = vld [vmem:[%s9 + $0x90] sm:$0xff]
  %v1992 = vld [vmem:[%s9 + $0x98] sm:$0xff]
  %v1993 = vld [vmem:[%s9 + $0xa0] sm:$0xff]
  %v1994 = vld [vmem:[%s9 + $0xa8] sm:$0xff]
  %v1995 = vld [vmem:[%s9 + $0xb0] sm:$0xff]
  %v1996 = vld [vmem:[%s9 + $0xb8] sm:$0xff]
  %v1997 = vld [vmem:[%s9 + $0xc0] sm:$0xff]
  %v1998 = vld [vmem:[%s9 + $0xc8] sm:$0xff]
  %v1999 = vld [vmem:[%s9 + $0xd0] sm:$0xff]
  %v2000 = vld [vmem:[%s9 + $0xd8] sm:$0xff]
  %v2001 = vld [vmem:[%s9 + $0xe0] sm:$0xff]
  %v2002 = vld [vmem:[%s9 + $0xe8] sm:$0xff]
  %v2003 = vld [vmem:[%s9 + $0xf0] sm:$0xff]
  %v2004 = vld [vmem:[%s9 + $0xf8] sm:$0xff]
  %v2005 = vld [vmem:[%s9 + $0x100] sm:$0xff]
  %v2006 = vld [vmem:[%s9 + $0x108] sm:$0xff]
  %v2007 = vld [vmem:[%s9 + $0x110] sm:$0xff]
  %v2008 = vld [vmem:[%s9 + $0x118] sm:$0xff]
  %v2009 = vld [vmem:[%s9 + $0x120] sm:$0xff]
  %v2010 = vld [vmem:[%s9 + $0x128] sm:$0xff]
  %v2011 = vld [vmem:[%s9 + $0x130] sm:$0xff]
  %v2012 = vld [vmem:[%s9 + $0x138] sm:$0xff]
  %v2013 = vld [vmem:[%s9 + $0x140] sm:$0xff]
  %v2055 = vunpack.c.l.b16 %v1973
  %v2056 = vunpack.c.h.b16 %v1973
  %v2057 = vunpack.c.l.b16 %v1974
  %v2058 = vunpack.c.h.b16 %v1974
  %v2059 = vunpack.c.l.b16 %v1975
  %v2060 = vunpack.c.h.b16 %v1975
  %v2061 = vunpack.c.l.b16 %v1976
  %v2062 = vunpack.c.h.b16 %v1976
  %v2063 = vunpack.c.l.b16 %v1977
  %v2064 = vunpack.c.h.b16 %v1977
  %v2065 = vunpack.c.l.b16 %v1978
  %v2066 = vunpack.c.h.b16 %v1978
  %v2067 = vunpack.c.l.b16 %v1979
  %v2068 = vunpack.c.h.b16 %v1979
  %v2069 = vunpack.c.l.b16 %v1980
  %v2070 = vunpack.c.h.b16 %v1980
  %v2071 = vunpack.c.l.b16 %v1981
  %v2072 = vunpack.c.h.b16 %v1981
  %v2073 = vunpack.c.l.b16 %v1982
  %v2074 = vunpack.c.h.b16 %v1982
  %v2075 = vunpack.c.l.b16 %v1983
  %v2076 = vunpack.c.h.b16 %v1983
  %v2077 = vunpack.c.l.b16 %v1984
  %v2078 = vunpack.c.h.b16 %v1984
  %v2079 = vunpack.c.l.b16 %v1985
  %v2080 = vunpack.c.h.b16 %v1985
  %v2081 = vunpack.c.l.b16 %v1986
  %v2082 = vunpack.c.h.b16 %v1986
  %v2083 = vunpack.c.l.b16 %v1987
  %v2084 = vunpack.c.h.b16 %v1987
  %v2085 = vunpack.c.l.b16 %v1988
  %v2086 = vunpack.c.h.b16 %v1988
  %v2087 = vunpack.c.l.b16 %v1989
  %v2088 = vunpack.c.h.b16 %v1989
  %v2089 = vunpack.c.l.b16 %v1990
  %v2090 = vunpack.c.h.b16 %v1990
  %v2091 = vunpack.c.l.b16 %v1991
  %v2092 = vunpack.c.h.b16 %v1991
  %v2093 = vunpack.c.l.b16 %v1992
  %v2094 = vunpack.c.h.b16 %v1992
  %v2095 = vunpack.c.l.b16 %v1993
  %v2096 = vunpack.c.h.b16 %v1993
  %v2097 = vunpack.c.l.b16 %v1994
  %v2098 = vunpack.c.h.b16 %v1994
  %v2099 = vunpack.c.l.b16 %v1995
  %v2100 = vunpack.c.h.b16 %v1995
  %v2101 = vunpack.c.l.b16 %v1996
  %v2102 = vunpack.c.h.b16 %v1996
  %v2103 = vunpack.c.l.b16 %v1997
  %v2104 = vunpack.c.h.b16 %v1997
  %v2105 = vunpack.c.l.b16 %v1998
  %v2106 = vunpack.c.h.b16 %v1998
  %v2107 = vunpack.c.l.b16 %v1999
  %v2108 = vunpack.c.h.b16 %v1999
  %v2109 = vunpack.c.l.b16 %v2000
  %v2110 = vunpack.c.h.b16 %v2000
  %v2111 = vunpack.c.l.b16 %v2001
  %v2112 = vunpack.c.h.b16 %v2001
  %v2113 = vunpack.c.l.b16 %v2002
  %v2114 = vunpack.c.h.b16 %v2002
  %v2115 = vunpack.c.l.b16 %v2003
  %v2116 = vunpack.c.h.b16 %v2003
  %v2117 = vunpack.c.l.b16 %v2004
  %v2118 = vunpack.c.h.b16 %v2004
  %v2119 = vunpack.c.l.b16 %v2005
  %v2120 = vunpack.c.h.b16 %v2005
  %v2121 = vunpack.c.l.b16 %v2006
  %v2122 = vunpack.c.h.b16 %v2006
  %v2123 = vunpack.c.l.b16 %v2007
  %v2124 = vunpack.c.h.b16 %v2007
  %v2125 = vunpack.c.l.b16 %v2008
  %v2126 = vunpack.c.h.b16 %v2008
  %v2127 = vunpack.c.l.b16 %v2009
  %v2128 = vunpack.c.h.b16 %v2009
  %v2129 = vunpack.c.l.b16 %v2010
  %v2130 = vunpack.c.h.b16 %v2010
  %v2131 = vunpack.c.l.b16 %v2011
  %v2132 = vunpack.c.h.b16 %v2011
  %v2133 = vunpack.c.l.b16 %v2012
  %v2134 = vunpack.c.h.b16 %v2012
  %v2135 = vunpack.c.l.b16 %v2013
  %v2136 = vunpack.c.h.b16 %v2013
  %v2137 = vpack.c.b16 %v2057, %v2055
  %v2138 = vpack.c.b16 %v2058, %v2056
  %v2139 = vpack.c.b16 %v2061, %v2059
  %v2140 = vpack.c.b16 %v2062, %v2060
  %v2141 = vpack.c.b16 %v2065, %v2063
  %v2142 = vpack.c.b16 %v2066, %v2064
  %v2143 = vpack.c.b16 %v2069, %v2067
  %v2144 = vpack.c.b16 %v2070, %v2068
  %v2145 = vpack.c.b16 %v2073, %v2071
  %v2146 = vpack.c.b16 %v2074, %v2072
  %v2147 = vpack.c.b16 %v2077, %v2075
  %v2148 = vpack.c.b16 %v2078, %v2076
  %v2149 = vpack.c.b16 %v2081, %v2079
  %v2150 = vpack.c.b16 %v2082, %v2080
  %v2151 = vpack.c.b16 %v2085, %v2083
  %v2152 = vpack.c.b16 %v2086, %v2084
  %v2153 = vpack.c.b16 %v2089, %v2087
  %v2154 = vpack.c.b16 %v2090, %v2088
  %v2155 = vpack.c.b16 %v2093, %v2091
  %v2156 = vpack.c.b16 %v2094, %v2092
  %v2157 = vpack.c.b16 %v2097, %v2095
  %v2158 = vpack.c.b16 %v2098, %v2096
  %v2159 = vpack.c.b16 %v2101, %v2099
  %v2160 = vpack.c.b16 %v2102, %v2100
  %v2161 = vpack.c.b16 %v2105, %v2103
  %v2162 = vpack.c.b16 %v2106, %v2104
  %v2163 = vpack.c.b16 %v2109, %v2107
  %v2164 = vpack.c.b16 %v2110, %v2108
  %v2165 = vpack.c.b16 %v2113, %v2111
  %v2166 = vpack.c.b16 %v2114, %v2112
  %v2167 = vpack.c.b16 %v2117, %v2115
  %v2168 = vpack.c.b16 %v2118, %v2116
  %v2169 = vpack.c.b16 %v2121, %v2119
  %v2170 = vpack.c.b16 %v2122, %v2120
  %v2171 = vpack.c.b16 %v2125, %v2123
  %v2172 = vpack.c.b16 %v2126, %v2124
  %v2173 = vpack.c.b16 %v2129, %v2127
  %v2174 = vpack.c.b16 %v2130, %v2128
  %v2175 = vpack.c.b16 %v2133, %v2131
  %v2176 = vpack.c.b16 %v2134, %v2132
  %v2177 = vpack.c.b16 %v2135, %v2135
  %v2178 = vpack.c.b16 %v2136, %v2136
  %v2220 = vsel %vm1884, %v2177, 0
  %v2223 = vsel %vm1884, %v2178, 0
  %2225 = vmatprep.subr.bf16.mxu0 %v2138
  %2226 = vmatpush1.bf16.msra.mxu0 %v2137
  %2227 = vmatprep.subr.bf16.mxu0 %v2140
  %2228 = vmatpush1.bf16.msra.mxu0 %v2139
  %2229 = vmatprep.subr.bf16.mxu0 %v2142
  %2230 = vmatpush1.bf16.msra.mxu0 %v2141
  %2231 = vmatprep.subr.bf16.mxu0 %v2144
  %2232 = vmatpush1.bf16.msra.mxu0 %v2143
  %2233 = vmatprep.subr.bf16.mxu0 %v2146
  %2234 = vmatpush1.bf16.msra.mxu0 %v2145
  %2235 = vmatprep.subr.bf16.mxu0 %v2148
  %2236 = vmatpush1.bf16.msra.mxu0 %v2147
  %2237 = vmatprep.subr.bf16.mxu0 %v2150
  %2238 = vmatpush1.bf16.msra.mxu0 %v2149
  %2239 = vmatprep.subr.bf16.mxu0 %v2152
  %2240 = vmatpush1.bf16.msra.mxu0 %v2151
  %2241 = vmatprep.subr.bf16.mxu0 %v2154
  %2242 = vmatpush1.bf16.msra.mxu0 %v2153
  %2243 = vmatprep.subr.bf16.mxu0 %v2156
  %2244 = vmatpush1.bf16.msra.mxu0 %v2155
  %2245 = vmatprep.subr.bf16.mxu0 %v2158
  %2246 = vmatpush1.bf16.msra.mxu0 %v2157
  %2247 = vmatprep.subr.bf16.mxu0 %v2160
  %2248 = vmatpush1.bf16.msra.mxu0 %v2159
  %2249 = vmatprep.subr.bf16.mxu0 %v2162
  %2250 = vmatpush1.bf16.msra.mxu0 %v2161
  %2251 = vmatprep.subr.bf16.mxu0 %v2164
  %2252 = vmatpush1.bf16.msra.mxu0 %v2163
  %2253 = vmatprep.subr.bf16.mxu0 %v2166
  %2254 = vmatpush1.bf16.msra.mxu0 %v2165
  %2255 = vmatprep.subr.bf16.mxu0 %v2168
  %2256 = vmatpush1.bf16.msra.mxu0 %v2167
  %2257 = vmatprep.mubr.bf16.mxu0 %v1632
  %2258 = vmatmul.mubr.bf16.gmra.mrb[0].mxu0 %v1631
  %v2259 = vpop.f32.mrb[0].mxu0
  %v2260 = vadd.f32 0.0, %v2259
  %v2261 = vpop.f32.mrb[0].mxu0
  %v2262 = vadd.f32 0.0, %v2261
  %v2263 = vpop.f32.mrb[0].mxu0
  %v2264 = vpop.f32.mrb[0].mxu0
  %2265 = vdwg.mxu0
  %2266 = vmatprep.subr.bf16.mxu0 %v2170
  %2267 = vmatpush1.bf16.msra.mxu0 %v2169
  %2268 = vmatprep.subr.bf16.mxu0 %v2172
  %2269 = vmatpush1.bf16.msra.mxu0 %v2171
  %2270 = vmatprep.subr.bf16.mxu0 %v2174
  %2271 = vmatpush1.bf16.msra.mxu0 %v2173
  %2272 = vmatprep.subr.bf16.mxu0 %v2176
  %2273 = vmatpush1.bf16.msra.mxu0 %v2175
  %2274 = vmatprep.subr.bf16.mxu0 %v2223
  %2275 = vmatpush1.bf16.msra.mxu0 %v2220
  %2276 = vmatprep.subr.bf16.mxu0 0
  %2277 = vmatpush1.bf16.msra.mxu0 0
  %2278 = vmatprep.subr.bf16.mxu0 0
  %2279 = vmatpush1.bf16.msra.mxu0 0
  %2280 = vmatprep.subr.bf16.mxu0 0
  %2281 = vmatpush1.bf16.msra.mxu0 0
  %2282 = vmatprep.subr.bf16.mxu0 0
  %2283 = vmatpush1.bf16.msra.mxu0 0
  %2284 = vmatprep.subr.bf16.mxu0 0
  %2285 = vmatpush1.bf16.msra.mxu0 0
  %2286 = vmatprep.subr.bf16.mxu0 0
  %2287 = vmatpush1.bf16.msra.mxu0 0
  %2288 = vmatprep.subr.bf16.mxu0 0
  %2289 = vmatpush1.bf16.msra.mxu0 0
  %2290 = vmatprep.subr.bf16.mxu0 0
  %2291 = vmatpush1.bf16.msra.mxu0 0
  %2292 = vmatprep.subr.bf16.mxu0 0
  %2293 = vmatpush1.bf16.msra.mxu0 0
  %2294 = vmatprep.subr.bf16.mxu0 0
  %2295 = vmatpush1.bf16.msra.mxu0 0
  %2296 = vmatprep.subr.bf16.mxu0 0
  %2297 = vmatpush1.bf16.msra.mxu0 0
  %2298 = vmatprep.mubr.bf16.mxu0 0
  %2299 = vmatmul.mubr.bf16.gmra.mrb[0].mxu0 %v1882
  %v2300 = vpop.f32.mrb[0].mxu0
  %v2301 = vadd.f32 %v2260, %v2300
  %v2302 = vpop.f32.mrb[0].mxu0
  %v2303 = vadd.f32 %v2262, %v2302
  %v2304 = vpop.f32.mrb[0].mxu0
  %v2305 = vpop.f32.mrb[0].mxu0
  %2306 = vdwg.mxu0
  %v2307 = vmax.f32 %v1967, %v2301
  %v2308 = vmax.f32 %v1969, %v2303
  %v2309 = vpack.c.bf16 %v2307, %v2307
  %v2310 = vpack.c.bf16 %v2308, %v2308
  %v2311 = vld [vmem:[%s10] sm:$0xf]
  %v2312 = vld [vmem:[%s10 + $0x4] sm:$0xf]
  %v2313 = vld [vmem:[%s10 + $0x8] sm:$0xf]
  %v2314 = vld [vmem:[%s10 + $0xc] sm:$0xf]
  %v2315 = vld [vmem:[%s10 + $0x10] sm:$0xf]
  %v2316 = vld [vmem:[%s10 + $0x14] sm:$0xf]
  %v2317 = vld [vmem:[%s10 + $0x18] sm:$0xf]
  %v2318 = vld [vmem:[%s10 + $0x1c] sm:$0xf]
  %v2319 = vld [vmem:[%s10 + $0x20] sm:$0xf]
  %v2320 = vld [vmem:[%s10 + $0x24] sm:$0xf]
  %v2321 = vld [vmem:[%s10 + $0x28] sm:$0xf]
  %v2322 = vld [vmem:[%s10 + $0x2c] sm:$0xf]
  %v2323 = vld [vmem:[%s10 + $0x30] sm:$0xf]
  %v2324 = vld [vmem:[%s10 + $0x34] sm:$0xf]
  %v2325 = vld [vmem:[%s10 + $0x38] sm:$0xf]
  %v2326 = vld [vmem:[%s10 + $0x3c] sm:$0xf]
  %v2327 = vld [vmem:[%s10 + $0x40] sm:$0xf]
  %v2328 = vld [vmem:[%s10 + $0x44] sm:$0xf]
  %v2329 = vld [vmem:[%s10 + $0x48] sm:$0xf]
  %v2330 = vld [vmem:[%s10 + $0x4c] sm:$0xf]
  %v2331 = vld [vmem:[%s11] sm:$0x1]
  %v2333 = vlaneseq
  %v2334 = vshrl.u32 %v2333, 7
  %v2335 = vsub.s32 0, %v2334
  %v2336 = vrot.slane %v2331, %v2335
  %v2358 = vunpack.c.l.b16 %v2311
  %v2359 = vunpack.c.l.b16 %v2312
  %v2360 = vunpack.c.l.b16 %v2313
  %v2361 = vunpack.c.l.b16 %v2314
  %v2362 = vunpack.c.l.b16 %v2315
  %v2363 = vunpack.c.l.b16 %v2316
  %v2364 = vunpack.c.l.b16 %v2317
  %v2365 = vunpack.c.l.b16 %v2318
  %v2366 = vunpack.c.l.b16 %v2319
  %v2367 = vunpack.c.l.b16 %v2320
  %v2368 = vunpack.c.l.b16 %v2321
  %v2369 = vunpack.c.l.b16 %v2322
  %v2370 = vunpack.c.l.b16 %v2323
  %v2371 = vunpack.c.l.b16 %v2324
  %v2372 = vunpack.c.l.b16 %v2325
  %v2373 = vunpack.c.l.b16 %v2326
  %v2374 = vunpack.c.l.b16 %v2327
  %v2375 = vunpack.c.l.b16 %v2328
  %v2376 = vunpack.c.l.b16 %v2329
  %v2377 = vunpack.c.l.b16 %v2330
  %v2378 = vpack.c.b16 %v2359, %v2358
  %v2379 = vpack.c.b16 %v2361, %v2360
  %v2380 = vpack.c.b16 %v2363, %v2362
  %v2381 = vpack.c.b16 %v2365, %v2364
  %v2382 = vpack.c.b16 %v2367, %v2366
  %v2383 = vpack.c.b16 %v2369, %v2368
  %v2384 = vpack.c.b16 %v2371, %v2370
  %v2385 = vpack.c.b16 %v2373, %v2372
  %v2386 = vpack.c.b16 %v2375, %v2374
  %v2387 = vpack.c.b16 %v2377, %v2376
  %vm2398 = vcmask 261120
  %v2400 = vsel %vm2398, %v2310, 0
  %2402 = vmatprep.subr.bf16.mxu0 0
  %2403 = vmatpush1.bf16.msra.mxu0 %v2378
  %2404 = vmatprep.subr.bf16.mxu0 0
  %2405 = vmatpush1.bf16.msra.mxu0 %v2379
  %2406 = vmatprep.subr.bf16.mxu0 0
  %2407 = vmatpush1.bf16.msra.mxu0 %v2380
  %2408 = vmatprep.subr.bf16.mxu0 0
  %2409 = vmatpush1.bf16.msra.mxu0 %v2381
  %2410 = vmatprep.subr.bf16.mxu0 0
  %2411 = vmatpush1.bf16.msra.mxu0 %v2382
  %2412 = vmatprep.subr.bf16.mxu0 0
  %2413 = vmatpush1.bf16.msra.mxu0 %v2383
  %2414 = vmatprep.subr.bf16.mxu0 0
  %2415 = vmatpush1.bf16.msra.mxu0 %v2384
  %2416 = vmatprep.subr.bf16.mxu0 0
  %2417 = vmatpush1.bf16.msra.mxu0 %v2385
  %2418 = vmatprep.subr.bf16.mxu0 0
  %2419 = vmatpush1.bf16.msra.mxu0 %v2386
  %2420 = vmatprep.subr.bf16.mxu0 0
  %2421 = vmatpush1.bf16.msra.mxu0 %v2387
  %2422 = vmatprep.subr.bf16.mxu0 0
  %2423 = vmatpush1.bf16.msra.mxu0 0
  %2424 = vmatprep.subr.bf16.mxu0 0
  %2425 = vmatpush1.bf16.msra.mxu0 0
  %2426 = vmatprep.subr.bf16.mxu0 0
  %2427 = vmatpush1.bf16.msra.mxu0 0
  %2428 = vmatprep.subr.bf16.mxu0 0
  %2429 = vmatpush1.bf16.msra.mxu0 0
  %2430 = vmatprep.subr.bf16.mxu0 0
  %2431 = vmatpush1.bf16.msra.mxu0 0
  %2432 = vmatprep.subr.bf16.mxu0 0
  %2433 = vmatpush1.bf16.msra.mxu0 0
  %2434 = vmatprep.mubr.bf16.mxu0 %v2400
  %2435 = vmatmul.mubr.bf16.gmra.mrb[0].mxu0 %v2309
  %v2436 = vpop.f32.mrb[0].mxu0
  %v2437 = vadd.f32 %v2336, %v2436
  %v2438 = vpop.f32.mrb[0].mxu0
  %v2439 = vpop.f32.mrb[0].mxu0
  %v2440 = vpop.f32.mrb[0].mxu0
  %2441 = vdwg.mxu0
  %v2442 = vmax.f32 %v2437, 0.0
  %v2443 = vpack.c.bf16 %v2442, %v2442
  %v2444 = vld [vmem:[%s12] sm:$0xf]
  %v2445 = vld [vmem:[%s12 + $0x4] sm:$0xf]
  %v2446 = vld [vmem:[%s12 + $0x8] sm:$0xf]
  %v2447 = vld [vmem:[%s12 + $0xc] sm:$0xf]
  %v2448 = vld [vmem:[%s13] sm:$0x1]
  %v2450 = vlaneseq
  %v2451 = vshrl.u32 %v2450, 7
  %v2452 = vsub.s32 0, %v2451
  %v2453 = vrot.slane %v2448, %v2452
  %v2459 = vunpack.c.l.b16 %v2444
  %v2460 = vunpack.c.l.b16 %v2445
  %v2461 = vunpack.c.l.b16 %v2446
  %v2462 = vunpack.c.l.b16 %v2447
  %v2463 = vpack.c.b16 %v2460, %v2459
  %v2464 = vpack.c.b16 %v2462, %v2461
  %v2468 = vsel %vm2398, %v2443, 0
  %2470 = vmatprep.subr.bf16.mxu0 0
  %2471 = vmatpush1.bf16.msra.mxu0 %v2463
  %2472 = vmatprep.subr.bf16.mxu0 0
  %2473 = vmatpush1.bf16.msra.mxu0 %v2464
  %2474 = vmatprep.subr.bf16.mxu0 0
  %2475 = vmatpush1.bf16.msra.mxu0 0
  %2476 = vmatprep.subr.bf16.mxu0 0
  %2477 = vmatpush1.bf16.msra.mxu0 0
  %2478 = vmatprep.subr.bf16.mxu0 0
  %2479 = vmatpush1.bf16.msra.mxu0 0
  %2480 = vmatprep.subr.bf16.mxu0 0
  %2481 = vmatpush1.bf16.msra.mxu0 0
  %2482 = vmatprep.subr.bf16.mxu0 0
  %2483 = vmatpush1.bf16.msra.mxu0 0
  %2484 = vmatprep.subr.bf16.mxu0 0
  %2485 = vmatpush1.bf16.msra.mxu0 0
  %2486 = vmatprep.subr.bf16.mxu0 0
  %2487 = vmatpush1.bf16.msra.mxu0 0
  %2488 = vmatprep.subr.bf16.mxu0 0
  %2489 = vmatpush1.bf16.msra.mxu0 0
  %2490 = vmatprep.subr.bf16.mxu0 0
  %2491 = vmatpush1.bf16.msra.mxu0 0
  %2492 = vmatprep.subr.bf16.mxu0 0
  %2493 = vmatpush1.bf16.msra.mxu0 0
  %2494 = vmatprep.subr.bf16.mxu0 0
  %2495 = vmatpush1.bf16.msra.mxu0 0
  %2496 = vmatprep.subr.bf16.mxu0 0
  %2497 = vmatpush1.bf16.msra.mxu0 0
  %2498 = vmatprep.subr.bf16.mxu0 0
  %2499 = vmatpush1.bf16.msra.mxu0 0
  %2500 = vmatprep.subr.bf16.mxu0 0
  %2501 = vmatpush1.bf16.msra.mxu0 0
  %2502 = vmatprep.mubr.bf16.mxu0 0
  %2503 = vmatmul.mubr.bf16.gmra.mrb[0].mxu0 %v2468
  %v2504 = vpop.f32.mrb[0].mxu0
  %v2505 = vadd.f32 %v2453, %v2504
  %v2506 = vpop.f32.mrb[0].mxu0
  %v2507 = vpop.f32.mrb[0].mxu0
  %v2508 = vpop.f32.mrb[0].mxu0
  %2509 = vdwg.mxu0
  %v2510 = vmax.f32 %v2505, 0.0
  %v2511 = vld [vmem:[%s1] sm:$0x3]
  %v2512 = vpack.c.bf16 %v2511, %v2511
  %v2513 = vpack.c.bf16 %v2510, %v2510
  %v2514 = vld [vmem:[%s14] sm:$0xf]
  %v2515 = vld [vmem:[%s14 + $0x4] sm:$0xf]
  %v2516 = vld [vmem:[%s14 + $0x8] sm:$0xf]
  %v2517 = vld [vmem:[%s14 + $0xc] sm:$0xf]
  %v2518 = vld [vmem:[%s15] sm:$0xf]
  %vm2519 = vcmask 64512
  %v2521 = vsel %vm2519, %v2512, 0
  %v2524 = vsel %vm1884, %v2518, 0
  %2526 = vmatprep.subr.bf16.mxu0 0
  %2527 = vmatpush1.bf16.msra.mxu0 %v2524
  %2528 = vmatprep.subr.bf16.mxu0 0
  %2529 = vmatpush1.bf16.msra.mxu0 0
  %2530 = vmatprep.subr.bf16.mxu0 0
  %2531 = vmatpush1.bf16.msra.mxu0 0
  %2532 = vmatprep.subr.bf16.mxu0 0
  %2533 = vmatpush1.bf16.msra.mxu0 0
  %2534 = vmatprep.subr.bf16.mxu0 0
  %2535 = vmatpush1.bf16.msra.mxu0 0
  %2536 = vmatprep.subr.bf16.mxu0 0
  %2537 = vmatpush1.bf16.msra.mxu0 0
  %2538 = vmatprep.subr.bf16.mxu0 0
  %2539 = vmatpush1.bf16.msra.mxu0 0
  %2540 = vmatprep.subr.bf16.mxu0 0
  %2541 = vmatpush1.bf16.msra.mxu0 0
  %2542 = vmatprep.subr.bf16.mxu0 0
  %2543 = vmatpush1.bf16.msra.mxu0 0
  %2544 = vmatprep.subr.bf16.mxu0 0
  %2545 = vmatpush1.bf16.msra.mxu0 0
  %2546 = vmatprep.subr.bf16.mxu0 0
  %2547 = vmatpush1.bf16.msra.mxu0 0
  %2548 = vmatprep.subr.bf16.mxu0 0
  %2549 = vmatpush1.bf16.msra.mxu0 0
  %2550 = vmatprep.subr.bf16.mxu0 0
  %2551 = vmatpush1.bf16.msra.mxu0 0
  %2552 = vmatprep.subr.bf16.mxu0 0
  %2553 = vmatpush1.bf16.msra.mxu0 0
  %2554 = vmatprep.subr.bf16.mxu0 0
  %2555 = vmatpush1.bf16.msra.mxu0 0
  %2556 = vmatprep.subr.bf16.mxu0 0
  %2557 = vmatpush1.bf16.msra.mxu0 0
  %2558 = vmatprep.mubr.bf16.mxu0 0
  %2559 = vmatmul.mubr.bf16.gmra.mrb[0].mxu0 %v2521
  %v2560 = vpop.f32.mrb[0].mxu0
  %v2561 = vadd.f32 0.0, %v2560
  %v2562 = vpop.f32.mrb[0].mxu0
  %v2563 = vpop.f32.mrb[0].mxu0
  %v2564 = vpop.f32.mrb[0].mxu0
  %2565 = vdwg.mxu0
  %v2570 = vunpack.c.l.b16 %v2514
  %v2571 = vunpack.c.l.b16 %v2515
  %v2572 = vunpack.c.l.b16 %v2516
  %v2573 = vunpack.c.l.b16 %v2517
  %v2574 = vpack.c.b16 %v2571, %v2570
  %v2575 = vpack.c.b16 %v2573, %v2572
  %v2579 = vsel %vm2398, %v2513, 0
  %2581 = vmatprep.subr.bf16.mxu0 0
  %2582 = vmatpush1.bf16.msra.mxu0 %v2574
  %2583 = vmatprep.subr.bf16.mxu0 0
  %2584 = vmatpush1.bf16.msra.mxu0 %v2575
  %2585 = vmatprep.subr.bf16.mxu0 0
  %2586 = vmatpush1.bf16.msra.mxu0 0
  %2587 = vmatprep.subr.bf16.mxu0 0
  %2588 = vmatpush1.bf16.msra.mxu0 0
  %2589 = vmatprep.subr.bf16.mxu0 0
  %2590 = vmatpush1.bf16.msra.mxu0 0
  %2591 = vmatprep.subr.bf16.mxu0 0
  %2592 = vmatpush1.bf16.msra.mxu0 0
  %2593 = vmatprep.subr.bf16.mxu0 0
  %2594 = vmatpush1.bf16.msra.mxu0 0
  %2595 = vmatprep.subr.bf16.mxu0 0
  %2596 = vmatpush1.bf16.msra.mxu0 0
  %2597 = vmatprep.subr.bf16.mxu0 0
  %2598 = vmatpush1.bf16.msra.mxu0 0
  %2599 = vmatprep.subr.bf16.mxu0 0
  %2600 = vmatpush1.bf16.msra.mxu0 0
  %2601 = vmatprep.subr.bf16.mxu0 0
  %2602 = vmatpush1.bf16.msra.mxu0 0
  %2603 = vmatprep.subr.bf16.mxu0 0
  %2604 = vmatpush1.bf16.msra.mxu0 0
  %2605 = vmatprep.subr.bf16.mxu0 0
  %2606 = vmatpush1.bf16.msra.mxu0 0
  %2607 = vmatprep.subr.bf16.mxu0 0
  %2608 = vmatpush1.bf16.msra.mxu0 0
  %2609 = vmatprep.subr.bf16.mxu0 0
  %2610 = vmatpush1.bf16.msra.mxu0 0
  %2611 = vmatprep.subr.bf16.mxu0 0
  %2612 = vmatpush1.bf16.msra.mxu0 0
  %2613 = vmatprep.mubr.bf16.mxu0 0
  %2614 = vmatmul.mubr.bf16.gmra.mrb[0].mxu0 %v2579
  %v2615 = vpop.f32.mrb[0].mxu0
  %v2616 = vadd.f32 %v2561, %v2615
  %v2617 = vpop.f32.mrb[0].mxu0
  %v2618 = vpop.f32.mrb[0].mxu0
  %v2619 = vpop.f32.mrb[0].mxu0
  %2620 = vdwg.mxu0
  %v2621 = vld [vmem:[%s16] sm:$0x1]
  %v2623 = vlaneseq
  %v2624 = vshrl.u32 %v2623, 7
  %v2625 = vsub.s32 0, %v2624
  %v2626 = vrot.slane %v2621, %v2625
  %v2628 = vadd.f32 %v2616, %v2626
  %v2629 = vmax.f32 %v2628, 0.0
  %v2630 = vpack.c.bf16 %v2629, %v2629
  %v2631 = vld [vmem:[%s17] sm:$0xf]
  %v2632 = vld [vmem:[%s17 + $0x4] sm:$0xf]
  %v2633 = vld [vmem:[%s18] sm:$0x1]
  %v2635 = vlaneseq
  %v2636 = vshrl.u32 %v2635, 7
  %v2637 = vsub.s32 0, %v2636
  %v2638 = vrot.slane %v2633, %v2637
  %v2642 = vunpack.c.l.b16 %v2631
  %v2643 = vunpack.c.l.b16 %v2632
  %v2644 = vpack.c.b16 %v2643, %v2642
  %vm2646 = vcmask 130048
  %v2648 = vsel %vm2646, %v2630, 0
  %2650 = vmatprep.subr.bf16.mxu0 0
  %2651 = vmatpush1.bf16.msra.mxu0 %v2644
  %2652 = vmatprep.subr.bf16.mxu0 0
  %2653 = vmatpush1.bf16.msra.mxu0 0
  %2654 = vmatprep.subr.bf16.mxu0 0
  %2655 = vmatpush1.bf16.msra.mxu0 0
  %2656 = vmatprep.subr.bf16.mxu0 0
  %2657 = vmatpush1.bf16.msra.mxu0 0
  %2658 = vmatprep.subr.bf16.mxu0 0
  %2659 = vmatpush1.bf16.msra.mxu0 0
  %2660 = vmatprep.subr.bf16.mxu0 0
  %2661 = vmatpush1.bf16.msra.mxu0 0
  %2662 = vmatprep.subr.bf16.mxu0 0
  %2663 = vmatpush1.bf16.msra.mxu0 0
  %2664 = vmatprep.subr.bf16.mxu0 0
  %2665 = vmatpush1.bf16.msra.mxu0 0
  %2666 = vmatprep.subr.bf16.mxu0 0
  %2667 = vmatpush1.bf16.msra.mxu0 0
  %2668 = vmatprep.subr.bf16.mxu0 0
  %2669 = vmatpush1.bf16.msra.mxu0 0
  %2670 = vmatprep.subr.bf16.mxu0 0
  %2671 = vmatpush1.bf16.msra.mxu0 0
  %2672 = vmatprep.subr.bf16.mxu0 0
  %2673 = vmatpush1.bf16.msra.mxu0 0
  %2674 = vmatprep.subr.bf16.mxu0 0
  %2675 = vmatpush1.bf16.msra.mxu0 0
  %2676 = vmatprep.subr.bf16.mxu0 0
  %2677 = vmatpush1.bf16.msra.mxu0 0
  %2678 = vmatprep.subr.bf16.mxu0 0
  %2679 = vmatpush1.bf16.msra.mxu0 0
  %2680 = vmatprep.subr.bf16.mxu0 0
  %2681 = vmatpush1.bf16.msra.mxu0 0
  %2682 = vmatprep.mubr.bf16.mxu0 0
  %2683 = vmatmul.mubr.bf16.gmra.mrb[0].mxu0 %v2648
  %v2684 = vpop.f32.mrb[0].mxu0
  %v2685 = vadd.f32 %v2638, %v2684
  %v2686 = vpop.f32.mrb[0].mxu0
  %v2687 = vpop.f32.mrb[0].mxu0
  %v2688 = vpop.f32.mrb[0].mxu0
  %2689 = vdwg.mxu0
  %v2690 = vmax.f32 %v2685, 0.0
  %v2691 = vld [vmem:[%s19] sm:$0x1]
  %v2693 = vlaneseq
  %v2694 = vshrl.u32 %v2693, 7
  %v2695 = vsub.s32 0, %v2694
  %v2696 = vrot.slane %v2691, %v2695
  %v2698 = vmul.f32 %v2690, %v2696
  %vm2699 = vcmask 123904
  %v2700 = vsel %vm2699, %v2698, 0.0
  %2701 = vadd.xlane.f32.xlu0 %v2700
  %v2702 = vpop.xlane.xlu0 %2701
  %v2703 = vld [vmem:[#allocation2] sm:$0x1]
  %v2705 = vlaneseq
  %v2706 = vshrl.u32 %v2705, 7
  %v2707 = vsub.s32 0, %v2706
  %v2708 = vrot.slane %v2703, %v2707
  %v2710 = vadd.f32 %v2702, %v2708
  %vm2711 = vcmask 1024
  %2712 = vst.msk [vmem:[%s21] sm:$0x3] %vm2711, %v2710
  // Predicated region
  $region86: #{cnn_dual_inputs_forward.1} parent=0 // pred_check
    _
  $region87: #{cnn_dual_inputs_forward.1} parent=0 // pred_check_branch
    %2714 = sbr.rel (0) target = $region89
  $region88: #{cnn_dual_inputs_forward.1} parent=0 // pred_region
    _
  $region89: #{cnn_dual_inputs_forward.1} parent=0 // pred_fallthru
    _
  // Predicated region
  $region90: #{cnn_dual_inputs_forward.1} parent=0 // pred_check
    _
  $region91: #{cnn_dual_inputs_forward.1} parent=0 // pred_check_branch
    %2716 = sbr.rel (0) target = $region93
  $region92: #{cnn_dual_inputs_forward.1} parent=0 // pred_region
    _
  $region93: #{cnn_dual_inputs_forward.1} parent=0 // pred_fallthru
    _

</llo_original>
